<compile_context>
chip_gen: v6e
topology: v6e:2x2x1
jax: 0.10.0
libtpu: 0.0.40
codegen_flags: <defaults>
</compile_context>

<pallas_src>
import functools

import jax
import jax.numpy as jnp
from jax import lax
from jax.experimental import pallas as pl
from jax.experimental.pallas import tpu as pltpu

# ----------------------- config (mirrors `args`) ------------------------
VOCAB_SIZE = 32
EMBEDDING_SIZE = 16
HIDDEN_SIZE = 32
NUM_LAYERS = 1
NUM_TAGS = 5
BATCH = 2
SEQ_LEN = 8

_VMEM_SPEC = pl.BlockSpec(memory_space=pltpu.MemorySpace.VMEM)


def _reorder_gates(w, axis):
    """PyTorch gate order [i, f, g, o] -> [i, f, o, g] along the 4H axis so
    the three sigmoid gates are one contiguous block (one EUP push)."""
    i, f, g, o = jnp.split(w, 4, axis=axis)
    return jnp.concatenate([i, f, o, g], axis=axis)


# --------------------------- fused kernel -------------------------------
def _fused_kernel(x_ref, wih_ref, whh_ref, b_ref, hc0_ref,
                  wlin_ref, vecs_ref, trans_ref,
                  tags_ref, mask_ref, loss_ref, *, T, B, H, K):
    """Fused BiLSTM + Linear + CRF (-mean log-likelihood).

    x:    (T*B, E)  flattened time-major embeddings (row = t*B + b)
    wih:  (E, 8H)   [fwd | bwd] input weights, gate order [i,f,o,g]
    whh:  (H, 8H)   [fwd | bwd] hidden weights, gate order [i,f,o,g]
    b:    (1, 8H)   combined biases (b_ih + b_hh) for both directions
    hc0:  (4B, H)   [h_fwd; h_bwd; c_fwd; c_bwd] initial states
    wlin: (2H, K)
    vecs: (3, K)    [b_lin; crf_start; crf_end]
    trans:(K, K)
    tags: (T*B, 1) int32   mask: (T*B, 1) float32
    loss: (1, 1)
    """
    f32 = jnp.float32
    H4 = 4 * H

    # ---- (1) hoisted input projection: one matmul for all T, both dirs ----
    xproj = (jnp.dot(x_ref[...], wih_ref[...],
                     preferred_element_type=f32) + b_ref[...])      # (T*B, 8H)

    # loop-invariant reads, hoisted out of the unrolled recurrences
    whh = whh_ref[...]                                              # (H, 8H)
    trans = trans_ref[...]                                          # (K, K)
    vecs = vecs_ref[...]                                            # (3, K)
    blin = vecs[0:1, :]                                             # (1, K)
    start = vecs[1:2, :]                                            # (1, K)
    end = vecs[2:3, :]                                              # (1, K)
    mask = mask_ref[...]                                            # (T*B, 1)

    # ---- (2) bidirectional recurrence, fully unrolled (T static, tiny) ----
    # Directions stacked along sublanes: rows 0:B = fwd, rows B:2B = bwd.
    h_st = hc0_ref[0:2 * B, :]                                      # (2B, H)
    c_st = hc0_ref[2 * B:4 * B, :]                                  # (2B, H)
    outs_f, outs_b = [], []
    for t in range(T):
        hg = jnp.dot(h_st, whh, preferred_element_type=f32)         # (2B, 8H)
        r_f = t * B                       # forward consumes time t
        r_b = (T - 1 - t) * B             # backward consumes time T-1-t
        pre_f = xproj[r_f:r_f + B, 0:H4] + hg[0:B, 0:H4]
        pre_b = xproj[r_b:r_b + B, H4:2 * H4] + hg[B:2 * B, H4:2 * H4]
        pre = jnp.concatenate([pre_f, pre_b], axis=0)               # (2B, 4H)
        # gate column order is [i, f, o, g]; one sigmoid block, one tanh
        sig = jax.nn.sigmoid(pre[:, 0:3 * H])
        i = sig[:, 0:H]
        f = sig[:, H:2 * H]
        o = sig[:, 2 * H:3 * H]
        g = jnp.tanh(pre[:, 3 * H:4 * H])
        c_st = f * c_st + i * g                                     # (2B, H)
        h_st = o * jnp.tanh(c_st)                                   # (2B, H)
        outs_f.append(h_st[0:B, :])
        outs_b.append(h_st[B:2 * B, :])

    hf_all = jnp.concatenate(outs_f, axis=0)                        # (T*B, H)
    hb_all = jnp.concatenate(outs_b[::-1], axis=0)                  # (T*B, H)
    hflat = jnp.concatenate([hf_all, hb_all], axis=1)               # (T*B, 2H)

    # ---- (3) linear projection -> emissions (stay in vregs / VMEM) ----
    em = (jnp.dot(hflat, wlin_ref[...], preferred_element_type=f32)
          + blin)                                                   # (T*B, K)

    # ---- (4) CRF numerator via vectorized one-hot selects ----
    tags = tags_ref[...]                                            # (T*B, 1)
    k_iota = lax.broadcasted_iota(jnp.int32, (T * B, K), 1)
    onehot = (k_iota == tags).astype(f32)                           # (T*B, K)

    oh_prev = onehot[:(T - 1) * B]        # tag at t-1 for rows t = 1..T-1
    oh_next = onehot[B:]                  # tag at t     for rows t = 1..T-1
    # trans_rows[r, j] = trans[tag_prev(r), j]   (unrolled over K_prev, VPU)
    trans_rows = oh_prev[:, 0:1] * trans[0:1, :]
    for i in range(1, K):
        trans_rows = trans_rows + oh_prev[:, i:i + 1] * trans[i:i + 1, :]

    # indicator of the last valid timestep of each sequence (mask monotone)
    mask_next = jnp.concatenate([mask[B:], jnp.zeros((B, 1), f32)], axis=0)
    last_ind = mask - mask_next                                     # (T*B, 1)

    # fold all gold-path contributions into one matrix, reduce once
    first = (start + em[0:B]) * onehot[0:B]                         # start+emit0
    rest = (em[B:] + trans_rows) * (oh_next * mask[B:])             # emit+trans
    numer_mat = (jnp.concatenate([first, rest], axis=0)
                 + onehot * (last_ind * end))                       # (T*B, K)
    numer_tot = jnp.sum(numer_mat, keepdims=True)                   # (1, 1)

    # ---- (5) CRF log-partition, unrolled; only (B, K) lane vectors ----
    score = start + em[0:B]                                         # (B, K)
    for t in range(1, T):
        r = t * B
        cands = [score[:, i:i + 1] + trans[i:i + 1, :] for i in range(K)]
        mx = cands[0]
        for i in range(1, K):
            mx = jnp.maximum(mx, cands[i])
        s = jnp.exp(cands[0] - mx)
        for i in range(1, K):
            s = s + jnp.exp(cands[i] - mx)
        nxt = jnp.log(s) + mx + em[r:r + B]
        score = jnp.where(mask[r:r + B] > 0.0, nxt, score)

    final = score + end                                             # (B, K)
    mfin = jnp.max(final, axis=1, keepdims=True)
    denom_b = jnp.log(jnp.sum(jnp.exp(final - mfin), axis=1,
                              keepdims=True)) + mfin                # (B, 1)
    denom_tot = jnp.sum(denom_b, keepdims=True)                     # (1, 1)

    # ---- (6) loss = -mean(log-likelihood) ----
    loss_ref[...] = (denom_tot - numer_tot) * (1.0 / B)


# ---------------------------- full forward ------------------------------
def bilstm_crf_loss(params, inputs, labels, mask):
    # embedding lookup (padding_idx=0 row is zero)
    emb = jnp.take(params['embedding'], inputs, axis=0)             # (B, T, E)
    B, T, E = emb.shape
    H, K = HIDDEN_SIZE, NUM_TAGS

    # time-major, flattened (row = t*B + b)
    x = jnp.transpose(emb, (1, 0, 2)).reshape(T * B, E).astype(jnp.float32)
    tags_tm = jnp.transpose(labels).reshape(T * B, 1).astype(jnp.int32)
    mask_tm = jnp.transpose(mask).reshape(T * B, 1).astype(jnp.float32)

    # pack both directions: 256-lane RHS for the input projection and a
    # side-by-side RHS for the hidden recurrence (one MXU push per step,
    # directions distinguished by sublane block of the stacked state).
    wih_f = _reorder_gates(params['w_ih_f'], 1)
    wih_b = _reorder_gates(params['w_ih_b'], 1)
    whh_f = _reorder_gates(params['w_hh_f'], 1)
    whh_b = _reorder_gates(params['w_hh_b'], 1)
    b_f = _reorder_gates(params['b_f'], 1)
    b_b = _reorder_gates(params['b_b'], 1)
    wih_pk = jnp.concatenate([wih_f, wih_b], axis=1)                # (E, 8H)
    whh_pk = jnp.concatenate([whh_f, whh_b], axis=1)                # (H, 8H)
    b_pk = jnp.concatenate([b_f, b_b], axis=1)                      # (1, 8H)

    # stacked initial states [h_fwd; h_bwd; c_fwd; c_bwd] and packed CRF vecs
    hc0 = jnp.concatenate([params['h0'].reshape(2 * B, H),
                           params['c0'].reshape(2 * B, H)], axis=0)  # (4B, H)
    crf_vecs = jnp.stack([params['b_lin'], params['crf_start'],
                          params['crf_end']], axis=0)                # (3, K)

    kernel = functools.partial(_fused_kernel, T=T, B=B, H=H, K=K)
    loss = pl.pallas_call(
        kernel,
        out_shape=jax.ShapeDtypeStruct((1, 1), jnp.float32),
        in_specs=[_VMEM_SPEC] * 10,
        out_specs=_VMEM_SPEC,
    )(x, wih_pk, whh_pk, b_pk, hc0, params['w_lin'], crf_vecs,
      params['crf_trans'], tags_tm, mask_tm)
    return loss[0, 0]


# ---------------------- pure-JAX reference (check) ----------------------
def _reference_loss(params, inputs, labels, mask):
    emb = jnp.take(params['embedding'], inputs, axis=0)             # (B, T, E)
    B, T, _ = emb.shape
    H, K = HIDDEN_SIZE, NUM_TAGS
    x = jnp.transpose(emb, (1, 0, 2)).astype(jnp.float32)           # (T, B, E)

    def lstm_dir(xs, w_ih, w_hh, b, h0, c0):
        def step(carry, x_t):
            h, c = carry
            g = x_t @ w_ih + h @ w_hh + b
            i = jax.nn.sigmoid(g[:, 0:H]); f = jax.nn.sigmoid(g[:, H:2 * H])
            gg = jnp.tanh(g[:, 2 * H:3 * H]); o = jax.nn.sigmoid(g[:, 3 * H:4 * H])
            c = f * c + i * gg
            h = o * jnp.tanh(c)
            return (h, c), h
        _, hs = lax.scan(step, (h0, c0), xs)
        return hs                                                   # (T, B, H)

    hf = lstm_dir(x, params['w_ih_f'], params['w_hh_f'], params['b_f'],
                  params['h0'][0], params['c0'][0])
    hb = lstm_dir(x[::-1], params['w_ih_b'], params['w_hh_b'], params['b_b'],
                  params['h0'][1], params['c0'][1])[::-1]
    out = jnp.concatenate([hf, hb], axis=-1)                        # (T, B, 2H)
    em = out @ params['w_lin'] + params['b_lin']                    # (T, B, K)
    em = jnp.transpose(em, (1, 0, 2))                               # (B, T, K)

    mask_f = mask.astype(jnp.float32)
    bidx = jnp.arange(B)
    score = params['crf_start'][labels[:, 0]] + em[bidx, 0, labels[:, 0]]
    for t in range(1, T):
        score = score + (params['crf_trans'][labels[:, t - 1], labels[:, t]]
                         + em[bidx, t, labels[:, t]]) * mask_f[:, t]
    seq_len = mask_f.sum(axis=1).astype(jnp.int32)
    score = score + params['crf_end'][labels[bidx, seq_len - 1]]

    alpha = params['crf_start'][None, :] + em[:, 0, :]
    for t in range(1, T):
        nxt = jax.nn.logsumexp(alpha[:, :, None]
                               + params['crf_trans'][None, :, :],
                               axis=1) + em[:, t, :]
        alpha = jnp.where(mask_f[:, t:t + 1] > 0, nxt, alpha)
    logz = jax.nn.logsumexp(alpha + params['crf_end'][None, :], axis=1)
    return -jnp.mean(score - logz)


# ------------------------- deterministic init ---------------------------
def init_params(key):
    H, E, K = HIDDEN_SIZE, EMBEDDING_SIZE, NUM_TAGS
    ks = jax.random.split(key, 14)
    s = 0.1
    emb = jax.random.normal(ks[0], (VOCAB_SIZE, E), jnp.float32) * s
    emb = emb.at[0].set(0.0)                       # padding_idx=0
    params = dict(
        embedding=emb,
        w_ih_f=jax.random.normal(ks[1], (E, 4 * H)) * s,
        w_hh_f=jax.random.normal(ks[2], (H, 4 * H)) * s,
        b_f=jax.random.normal(ks[3], (1, 4 * H)) * s,   # b_ih + b_hh combined
        w_ih_b=jax.random.normal(ks[4], (E, 4 * H)) * s,
        w_hh_b=jax.random.normal(ks[5], (H, 4 * H)) * s,
        b_b=jax.random.normal(ks[6], (1, 4 * H)) * s,
        w_lin=jax.random.normal(ks[7], (2 * H, K)) * s,
        b_lin=jax.random.normal(ks[8], (K,)) * s,
        crf_start=jax.random.normal(ks[9], (K,)) * s,
        crf_trans=jax.random.normal(ks[10], (K, K)) * s,
        crf_end=jax.random.normal(ks[11], (K,)) * s,
        # init_hidden(): randn initial states (2*num_layers, B, H)
        h0=jax.random.normal(ks[12], (2 * NUM_LAYERS, BATCH, H)),
        c0=jax.random.normal(ks[13], (2 * NUM_LAYERS, BATCH, H)),
    )
    return {k: v.astype(jnp.float32) for k, v in params.items()}


if __name__ == "__main__":
    key = jax.random.PRNGKey(0)
    k_param, k_in, k_lab = jax.random.split(key, 3)
    params = init_params(k_param)

    lengths = jnp.array([SEQ_LEN, SEQ_LEN - 2], dtype=jnp.int32)
    mask = (jnp.arange(SEQ_LEN)[None, :] < lengths[:, None]).astype(jnp.int32)
    inputs = jax.random.randint(k_in, (BATCH, SEQ_LEN), 1, VOCAB_SIZE)
    inputs = inputs * mask                         # pad positions -> token 0
    labels = jax.random.randint(k_lab, (BATCH, SEQ_LEN), 0, NUM_TAGS)

    loss_fn = jax.jit(bilstm_crf_loss)
    loss = loss_fn(params, inputs, labels, mask)
    jax.block_until_ready(loss)
    assert bool(jnp.isfinite(loss)), "loss is not finite"

    # sanity cross-check against a plain-JAX reference (loose tolerance:
    # MXU matmul precision may differ slightly between Mosaic and XLA)
    ref = _reference_loss(params, inputs, labels, mask)
    assert bool(jnp.abs(loss - ref) < 5e-2), (float(loss), float(ref))

    print("KERNEL_OK")
</pallas_src>

<mosaic_0001>
module attributes {stable_mosaic.version = 11 : i64} {
  func.func @_fused_kernel(%arg0: memref<16x16xf32, #tpu.memory_space<vmem>>, %arg1: memref<16x256xf32, #tpu.memory_space<vmem>>, %arg2: memref<32x256xf32, #tpu.memory_space<vmem>>, %arg3: memref<1x256xf32, #tpu.memory_space<vmem>>, %arg4: memref<8x32xf32, #tpu.memory_space<vmem>>, %arg5: memref<64x5xf32, #tpu.memory_space<vmem>>, %arg6: memref<3x5xf32, #tpu.memory_space<vmem>>, %arg7: memref<5x5xf32, #tpu.memory_space<vmem>>, %arg8: memref<16x1xi32, #tpu.memory_space<vmem>>, %arg9: memref<16x1xf32, #tpu.memory_space<vmem>>, %arg10: memref<1x1xf32, #tpu.memory_space<vmem>>) attributes {dimension_semantics = [], scalar_prefetch = 0 : i64, scratch_operands = 0 : i64, tpu.core_type = #tpu.core_type<tc>} {
    %c0 = arith.constant 0 : index
    %c0_0 = arith.constant 0 : index
    %0 = vector.load %arg0[%c0, %c0_0] : memref<16x16xf32, #tpu.memory_space<vmem>>, vector<16x16xf32>
    %c0_1 = arith.constant 0 : index
    %c0_2 = arith.constant 0 : index
    %1 = vector.load %arg1[%c0_1, %c0_2] : memref<16x256xf32, #tpu.memory_space<vmem>>, vector<16x256xf32>
    %cst = arith.constant dense<0.000000e+00> : vector<16x256xf32>
    %2 = tpu.matmul %0, %1, %cst {dimension_numbers = #tpu.dot_dimension_numbers<[1], [0], [0], [1], [0, 0, 1, 1], [], []>} : vector<16x16xf32>, vector<16x256xf32>, vector<16x256xf32> -> vector<16x256xf32>
    %c0_3 = arith.constant 0 : index
    %c0_4 = arith.constant 0 : index
    %3 = vector.load %arg3[%c0_3, %c0_4] : memref<1x256xf32, #tpu.memory_space<vmem>>, vector<1x256xf32>
    %4 = vector.broadcast %3 : vector<1x256xf32> to vector<16x256xf32>
    %5 = arith.addf %2, %4 : vector<16x256xf32>
    %c0_5 = arith.constant 0 : index
    %c0_6 = arith.constant 0 : index
    %6 = vector.load %arg2[%c0_5, %c0_6] : memref<32x256xf32, #tpu.memory_space<vmem>>, vector<32x256xf32>
    %c0_7 = arith.constant 0 : index
    %c0_8 = arith.constant 0 : index
    %7 = vector.load %arg7[%c0_7, %c0_8] : memref<5x5xf32, #tpu.memory_space<vmem>>, vector<5x5xf32>
    %c0_9 = arith.constant 0 : index
    %c0_10 = arith.constant 0 : index
    %8 = vector.load %arg6[%c0_9, %c0_10] : memref<3x5xf32, #tpu.memory_space<vmem>>, vector<3x5xf32>
    %9 = vector.extract_strided_slice %8 {offsets = [0, 0], sizes = [1, 5], strides = [1, 1]} : vector<3x5xf32> to vector<1x5xf32>
    %10 = vector.extract_strided_slice %8 {offsets = [1, 0], sizes = [1, 5], strides = [1, 1]} : vector<3x5xf32> to vector<1x5xf32>
    %11 = vector.extract_strided_slice %8 {offsets = [2, 0], sizes = [1, 5], strides = [1, 1]} : vector<3x5xf32> to vector<1x5xf32>
    %c0_11 = arith.constant 0 : index
    %c0_12 = arith.constant 0 : index
    %12 = vector.load %arg9[%c0_11, %c0_12] : memref<16x1xf32, #tpu.memory_space<vmem>>, vector<16x1xf32>
    %c0_13 = arith.constant 0 : index
    %c0_14 = arith.constant 0 : index
    %13 = vector.load %arg4[%c0_13, %c0_14] : memref<8x32xf32, #tpu.memory_space<vmem>>, vector<4x32xf32>
    %c4 = arith.constant 4 : index
    %c0_15 = arith.constant 0 : index
    %14 = vector.load %arg4[%c4, %c0_15] : memref<8x32xf32, #tpu.memory_space<vmem>>, vector<4x32xf32>
    %cst_16 = arith.constant dense<0.000000e+00> : vector<4x256xf32>
    %15 = tpu.matmul %13, %6, %cst_16 {dimension_numbers = #tpu.dot_dimension_numbers<[1], [0], [0], [1], [0, 0, 1, 1], [], []>} : vector<4x32xf32>, vector<32x256xf32>, vector<4x256xf32> -> vector<4x256xf32>
    %16 = vector.extract_strided_slice %5 {offsets = [0, 0], sizes = [2, 128], strides = [1, 1]} : vector<16x256xf32> to vector<2x128xf32>
    %17 = vector.extract_strided_slice %15 {offsets = [0, 0], sizes = [2, 128], strides = [1, 1]} : vector<4x256xf32> to vector<2x128xf32>
    %18 = arith.addf %16, %17 : vector<2x128xf32>
    %19 = vector.extract_strided_slice %5 {offsets = [14, 128], sizes = [2, 128], strides = [1, 1]} : vector<16x256xf32> to vector<2x128xf32>
    %20 = vector.extract_strided_slice %15 {offsets = [2, 128], sizes = [2, 128], strides = [1, 1]} : vector<4x256xf32> to vector<2x128xf32>
    %21 = arith.addf %19, %20 : vector<2x128xf32>
    %22 = tpu.concatenate %18, %21 in 0 : vector<2x128xf32>, vector<2x128xf32> -> vector<4x128xf32>
    %23 = vector.extract_strided_slice %22 {offsets = [0, 0], sizes = [4, 96], strides = [1, 1]} : vector<4x128xf32> to vector<4x96xf32>
    %24 = arith.negf %23 : vector<4x96xf32>
    %25 = math.exp %24 : vector<4x96xf32>
    %cst_17 = arith.constant 1.000000e+00 : f32
    %26 = vector.broadcast %cst_17 : f32 to vector<4x96xf32>
    %27 = arith.addf %26, %25 : vector<4x96xf32>
    %28 = arith.divf %26, %27 : vector<4x96xf32>
    %29 = vector.extract_strided_slice %28 {offsets = [0, 0], sizes = [4, 32], strides = [1, 1]} : vector<4x96xf32> to vector<4x32xf32>
    %30 = vector.extract_strided_slice %28 {offsets = [0, 32], sizes = [4, 32], strides = [1, 1]} : vector<4x96xf32> to vector<4x32xf32>
    %31 = vector.extract_strided_slice %28 {offsets = [0, 64], sizes = [4, 32], strides = [1, 1]} : vector<4x96xf32> to vector<4x32xf32>
    %32 = vector.extract_strided_slice %22 {offsets = [0, 96], sizes = [4, 32], strides = [1, 1]} : vector<4x128xf32> to vector<4x32xf32>
    %33 = math.tanh %32 : vector<4x32xf32>
    %34 = arith.mulf %30, %14 : vector<4x32xf32>
    %35 = arith.mulf %29, %33 : vector<4x32xf32>
    %36 = arith.addf %34, %35 : vector<4x32xf32>
    %37 = math.tanh %36 : vector<4x32xf32>
    %38 = arith.mulf %31, %37 : vector<4x32xf32>
    %39 = vector.extract_strided_slice %38 {offsets = [0, 0], sizes = [2, 32], strides = [1, 1]} : vector<4x32xf32> to vector<2x32xf32>
    %40 = vector.extract_strided_slice %38 {offsets = [2, 0], sizes = [2, 32], strides = [1, 1]} : vector<4x32xf32> to vector<2x32xf32>
    %cst_18 = arith.constant dense<0.000000e+00> : vector<4x256xf32>
    %41 = tpu.matmul %38, %6, %cst_18 {dimension_numbers = #tpu.dot_dimension_numbers<[1], [0], [0], [1], [0, 0, 1, 1], [], []>} : vector<4x32xf32>, vector<32x256xf32>, vector<4x256xf32> -> vector<4x256xf32>
    %42 = vector.extract_strided_slice %5 {offsets = [2, 0], sizes = [2, 128], strides = [1, 1]} : vector<16x256xf32> to vector<2x128xf32>
    %43 = vector.extract_strided_slice %41 {offsets = [0, 0], sizes = [2, 128], strides = [1, 1]} : vector<4x256xf32> to vector<2x128xf32>
    %44 = arith.addf %42, %43 : vector<2x128xf32>
    %45 = vector.extract_strided_slice %5 {offsets = [12, 128], sizes = [2, 128], strides = [1, 1]} : vector<16x256xf32> to vector<2x128xf32>
    %46 = vector.extract_strided_slice %41 {offsets = [2, 128], sizes = [2, 128], strides = [1, 1]} : vector<4x256xf32> to vector<2x128xf32>
    %47 = arith.addf %45, %46 : vector<2x128xf32>
    %48 = tpu.concatenate %44, %47 in 0 : vector<2x128xf32>, vector<2x128xf32> -> vector<4x128xf32>
    %49 = vector.extract_strided_slice %48 {offsets = [0, 0], sizes = [4, 96], strides = [1, 1]} : vector<4x128xf32> to vector<4x96xf32>
    %50 = arith.negf %49 : vector<4x96xf32>
    %51 = math.exp %50 : vector<4x96xf32>
    %cst_19 = arith.constant 1.000000e+00 : f32
    %52 = vector.broadcast %cst_19 : f32 to vector<4x96xf32>
    %53 = arith.addf %52, %51 : vector<4x96xf32>
    %54 = arith.divf %52, %53 : vector<4x96xf32>
    %55 = vector.extract_strided_slice %54 {offsets = [0, 0], sizes = [4, 32], strides = [1, 1]} : vector<4x96xf32> to vector<4x32xf32>
    %56 = vector.extract_strided_slice %54 {offsets = [0, 32], sizes = [4, 32], strides = [1, 1]} : vector<4x96xf32> to vector<4x32xf32>
    %57 = vector.extract_strided_slice %54 {offsets = [0, 64], sizes = [4, 32], strides = [1, 1]} : vector<4x96xf32> to vector<4x32xf32>
    %58 = vector.extract_strided_slice %48 {offsets = [0, 96], sizes = [4, 32], strides = [1, 1]} : vector<4x128xf32> to vector<4x32xf32>
    %59 = math.tanh %58 : vector<4x32xf32>
    %60 = arith.mulf %56, %36 : vector<4x32xf32>
    %61 = arith.mulf %55, %59 : vector<4x32xf32>
    %62 = arith.addf %60, %61 : vector<4x32xf32>
    %63 = math.tanh %62 : vector<4x32xf32>
    %64 = arith.mulf %57, %63 : vector<4x32xf32>
    %65 = vector.extract_strided_slice %64 {offsets = [0, 0], sizes = [2, 32], strides = [1, 1]} : vector<4x32xf32> to vector<2x32xf32>
    %66 = vector.extract_strided_slice %64 {offsets = [2, 0], sizes = [2, 32], strides = [1, 1]} : vector<4x32xf32> to vector<2x32xf32>
    %cst_20 = arith.constant dense<0.000000e+00> : vector<4x256xf32>
    %67 = tpu.matmul %64, %6, %cst_20 {dimension_numbers = #tpu.dot_dimension_numbers<[1], [0], [0], [1], [0, 0, 1, 1], [], []>} : vector<4x32xf32>, vector<32x256xf32>, vector<4x256xf32> -> vector<4x256xf32>
    %68 = vector.extract_strided_slice %5 {offsets = [4, 0], sizes = [2, 128], strides = [1, 1]} : vector<16x256xf32> to vector<2x128xf32>
    %69 = vector.extract_strided_slice %67 {offsets = [0, 0], sizes = [2, 128], strides = [1, 1]} : vector<4x256xf32> to vector<2x128xf32>
    %70 = arith.addf %68, %69 : vector<2x128xf32>
    %71 = vector.extract_strided_slice %5 {offsets = [10, 128], sizes = [2, 128], strides = [1, 1]} : vector<16x256xf32> to vector<2x128xf32>
    %72 = vector.extract_strided_slice %67 {offsets = [2, 128], sizes = [2, 128], strides = [1, 1]} : vector<4x256xf32> to vector<2x128xf32>
    %73 = arith.addf %71, %72 : vector<2x128xf32>
    %74 = tpu.concatenate %70, %73 in 0 : vector<2x128xf32>, vector<2x128xf32> -> vector<4x128xf32>
    %75 = vector.extract_strided_slice %74 {offsets = [0, 0], sizes = [4, 96], strides = [1, 1]} : vector<4x128xf32> to vector<4x96xf32>
    %76 = arith.negf %75 : vector<4x96xf32>
    %77 = math.exp %76 : vector<4x96xf32>
    %cst_21 = arith.constant 1.000000e+00 : f32
    %78 = vector.broadcast %cst_21 : f32 to vector<4x96xf32>
    %79 = arith.addf %78, %77 : vector<4x96xf32>
    %80 = arith.divf %78, %79 : vector<4x96xf32>
    %81 = vector.extract_strided_slice %80 {offsets = [0, 0], sizes = [4, 32], strides = [1, 1]} : vector<4x96xf32> to vector<4x32xf32>
    %82 = vector.extract_strided_slice %80 {offsets = [0, 32], sizes = [4, 32], strides = [1, 1]} : vector<4x96xf32> to vector<4x32xf32>
    %83 = vector.extract_strided_slice %80 {offsets = [0, 64], sizes = [4, 32], strides = [1, 1]} : vector<4x96xf32> to vector<4x32xf32>
    %84 = vector.extract_strided_slice %74 {offsets = [0, 96], sizes = [4, 32], strides = [1, 1]} : vector<4x128xf32> to vector<4x32xf32>
    %85 = math.tanh %84 : vector<4x32xf32>
    %86 = arith.mulf %82, %62 : vector<4x32xf32>
    %87 = arith.mulf %81, %85 : vector<4x32xf32>
    %88 = arith.addf %86, %87 : vector<4x32xf32>
    %89 = math.tanh %88 : vector<4x32xf32>
    %90 = arith.mulf %83, %89 : vector<4x32xf32>
    %91 = vector.extract_strided_slice %90 {offsets = [0, 0], sizes = [2, 32], strides = [1, 1]} : vector<4x32xf32> to vector<2x32xf32>
    %92 = vector.extract_strided_slice %90 {offsets = [2, 0], sizes = [2, 32], strides = [1, 1]} : vector<4x32xf32> to vector<2x32xf32>
    %cst_22 = arith.constant dense<0.000000e+00> : vector<4x256xf32>
    %93 = tpu.matmul %90, %6, %cst_22 {dimension_numbers = #tpu.dot_dimension_numbers<[1], [0], [0], [1], [0, 0, 1, 1], [], []>} : vector<4x32xf32>, vector<32x256xf32>, vector<4x256xf32> -> vector<4x256xf32>
    %94 = vector.extract_strided_slice %5 {offsets = [6, 0], sizes = [2, 128], strides = [1, 1]} : vector<16x256xf32> to vector<2x128xf32>
    %95 = vector.extract_strided_slice %93 {offsets = [0, 0], sizes = [2, 128], strides = [1, 1]} : vector<4x256xf32> to vector<2x128xf32>
    %96 = arith.addf %94, %95 : vector<2x128xf32>
    %97 = vector.extract_strided_slice %5 {offsets = [8, 128], sizes = [2, 128], strides = [1, 1]} : vector<16x256xf32> to vector<2x128xf32>
    %98 = vector.extract_strided_slice %93 {offsets = [2, 128], sizes = [2, 128], strides = [1, 1]} : vector<4x256xf32> to vector<2x128xf32>
    %99 = arith.addf %97, %98 : vector<2x128xf32>
    %100 = tpu.concatenate %96, %99 in 0 : vector<2x128xf32>, vector<2x128xf32> -> vector<4x128xf32>
    %101 = vector.extract_strided_slice %100 {offsets = [0, 0], sizes = [4, 96], strides = [1, 1]} : vector<4x128xf32> to vector<4x96xf32>
    %102 = arith.negf %101 : vector<4x96xf32>
    %103 = math.exp %102 : vector<4x96xf32>
    %cst_23 = arith.constant 1.000000e+00 : f32
    %104 = vector.broadcast %cst_23 : f32 to vector<4x96xf32>
    %105 = arith.addf %104, %103 : vector<4x96xf32>
    %106 = arith.divf %104, %105 : vector<4x96xf32>
    %107 = vector.extract_strided_slice %106 {offsets = [0, 0], sizes = [4, 32], strides = [1, 1]} : vector<4x96xf32> to vector<4x32xf32>
    %108 = vector.extract_strided_slice %106 {offsets = [0, 32], sizes = [4, 32], strides = [1, 1]} : vector<4x96xf32> to vector<4x32xf32>
    %109 = vector.extract_strided_slice %106 {offsets = [0, 64], sizes = [4, 32], strides = [1, 1]} : vector<4x96xf32> to vector<4x32xf32>
    %110 = vector.extract_strided_slice %100 {offsets = [0, 96], sizes = [4, 32], strides = [1, 1]} : vector<4x128xf32> to vector<4x32xf32>
    %111 = math.tanh %110 : vector<4x32xf32>
    %112 = arith.mulf %108, %88 : vector<4x32xf32>
    %113 = arith.mulf %107, %111 : vector<4x32xf32>
    %114 = arith.addf %112, %113 : vector<4x32xf32>
    %115 = math.tanh %114 : vector<4x32xf32>
    %116 = arith.mulf %109, %115 : vector<4x32xf32>
    %117 = vector.extract_strided_slice %116 {offsets = [0, 0], sizes = [2, 32], strides = [1, 1]} : vector<4x32xf32> to vector<2x32xf32>
    %118 = vector.extract_strided_slice %116 {offsets = [2, 0], sizes = [2, 32], strides = [1, 1]} : vector<4x32xf32> to vector<2x32xf32>
    %cst_24 = arith.constant dense<0.000000e+00> : vector<4x256xf32>
    %119 = tpu.matmul %116, %6, %cst_24 {dimension_numbers = #tpu.dot_dimension_numbers<[1], [0], [0], [1], [0, 0, 1, 1], [], []>} : vector<4x32xf32>, vector<32x256xf32>, vector<4x256xf32> -> vector<4x256xf32>
    %120 = vector.extract_strided_slice %5 {offsets = [8, 0], sizes = [2, 128], strides = [1, 1]} : vector<16x256xf32> to vector<2x128xf32>
    %121 = vector.extract_strided_slice %119 {offsets = [0, 0], sizes = [2, 128], strides = [1, 1]} : vector<4x256xf32> to vector<2x128xf32>
    %122 = arith.addf %120, %121 : vector<2x128xf32>
    %123 = vector.extract_strided_slice %5 {offsets = [6, 128], sizes = [2, 128], strides = [1, 1]} : vector<16x256xf32> to vector<2x128xf32>
    %124 = vector.extract_strided_slice %119 {offsets = [2, 128], sizes = [2, 128], strides = [1, 1]} : vector<4x256xf32> to vector<2x128xf32>
    %125 = arith.addf %123, %124 : vector<2x128xf32>
    %126 = tpu.concatenate %122, %125 in 0 : vector<2x128xf32>, vector<2x128xf32> -> vector<4x128xf32>
    %127 = vector.extract_strided_slice %126 {offsets = [0, 0], sizes = [4, 96], strides = [1, 1]} : vector<4x128xf32> to vector<4x96xf32>
    %128 = arith.negf %127 : vector<4x96xf32>
    %129 = math.exp %128 : vector<4x96xf32>
    %cst_25 = arith.constant 1.000000e+00 : f32
    %130 = vector.broadcast %cst_25 : f32 to vector<4x96xf32>
    %131 = arith.addf %130, %129 : vector<4x96xf32>
    %132 = arith.divf %130, %131 : vector<4x96xf32>
    %133 = vector.extract_strided_slice %132 {offsets = [0, 0], sizes = [4, 32], strides = [1, 1]} : vector<4x96xf32> to vector<4x32xf32>
    %134 = vector.extract_strided_slice %132 {offsets = [0, 32], sizes = [4, 32], strides = [1, 1]} : vector<4x96xf32> to vector<4x32xf32>
    %135 = vector.extract_strided_slice %132 {offsets = [0, 64], sizes = [4, 32], strides = [1, 1]} : vector<4x96xf32> to vector<4x32xf32>
    %136 = vector.extract_strided_slice %126 {offsets = [0, 96], sizes = [4, 32], strides = [1, 1]} : vector<4x128xf32> to vector<4x32xf32>
    %137 = math.tanh %136 : vector<4x32xf32>
    %138 = arith.mulf %134, %114 : vector<4x32xf32>
    %139 = arith.mulf %133, %137 : vector<4x32xf32>
    %140 = arith.addf %138, %139 : vector<4x32xf32>
    %141 = math.tanh %140 : vector<4x32xf32>
    %142 = arith.mulf %135, %141 : vector<4x32xf32>
    %143 = vector.extract_strided_slice %142 {offsets = [0, 0], sizes = [2, 32], strides = [1, 1]} : vector<4x32xf32> to vector<2x32xf32>
    %144 = vector.extract_strided_slice %142 {offsets = [2, 0], sizes = [2, 32], strides = [1, 1]} : vector<4x32xf32> to vector<2x32xf32>
    %cst_26 = arith.constant dense<0.000000e+00> : vector<4x256xf32>
    %145 = tpu.matmul %142, %6, %cst_26 {dimension_numbers = #tpu.dot_dimension_numbers<[1], [0], [0], [1], [0, 0, 1, 1], [], []>} : vector<4x32xf32>, vector<32x256xf32>, vector<4x256xf32> -> vector<4x256xf32>
    %146 = vector.extract_strided_slice %5 {offsets = [10, 0], sizes = [2, 128], strides = [1, 1]} : vector<16x256xf32> to vector<2x128xf32>
    %147 = vector.extract_strided_slice %145 {offsets = [0, 0], sizes = [2, 128], strides = [1, 1]} : vector<4x256xf32> to vector<2x128xf32>
    %148 = arith.addf %146, %147 : vector<2x128xf32>
    %149 = vector.extract_strided_slice %5 {offsets = [4, 128], sizes = [2, 128], strides = [1, 1]} : vector<16x256xf32> to vector<2x128xf32>
    %150 = vector.extract_strided_slice %145 {offsets = [2, 128], sizes = [2, 128], strides = [1, 1]} : vector<4x256xf32> to vector<2x128xf32>
    %151 = arith.addf %149, %150 : vector<2x128xf32>
    %152 = tpu.concatenate %148, %151 in 0 : vector<2x128xf32>, vector<2x128xf32> -> vector<4x128xf32>
    %153 = vector.extract_strided_slice %152 {offsets = [0, 0], sizes = [4, 96], strides = [1, 1]} : vector<4x128xf32> to vector<4x96xf32>
    %154 = arith.negf %153 : vector<4x96xf32>
    %155 = math.exp %154 : vector<4x96xf32>
    %cst_27 = arith.constant 1.000000e+00 : f32
    %156 = vector.broadcast %cst_27 : f32 to vector<4x96xf32>
    %157 = arith.addf %156, %155 : vector<4x96xf32>
    %158 = arith.divf %156, %157 : vector<4x96xf32>
    %159 = vector.extract_strided_slice %158 {offsets = [0, 0], sizes = [4, 32], strides = [1, 1]} : vector<4x96xf32> to vector<4x32xf32>
    %160 = vector.extract_strided_slice %158 {offsets = [0, 32], sizes = [4, 32], strides = [1, 1]} : vector<4x96xf32> to vector<4x32xf32>
    %161 = vector.extract_strided_slice %158 {offsets = [0, 64], sizes = [4, 32], strides = [1, 1]} : vector<4x96xf32> to vector<4x32xf32>
    %162 = vector.extract_strided_slice %152 {offsets = [0, 96], sizes = [4, 32], strides = [1, 1]} : vector<4x128xf32> to vector<4x32xf32>
    %163 = math.tanh %162 : vector<4x32xf32>
    %164 = arith.mulf %160, %140 : vector<4x32xf32>
    %165 = arith.mulf %159, %163 : vector<4x32xf32>
    %166 = arith.addf %164, %165 : vector<4x32xf32>
    %167 = math.tanh %166 : vector<4x32xf32>
    %168 = arith.mulf %161, %167 : vector<4x32xf32>
    %169 = vector.extract_strided_slice %168 {offsets = [0, 0], sizes = [2, 32], strides = [1, 1]} : vector<4x32xf32> to vector<2x32xf32>
    %170 = vector.extract_strided_slice %168 {offsets = [2, 0], sizes = [2, 32], strides = [1, 1]} : vector<4x32xf32> to vector<2x32xf32>
    %cst_28 = arith.constant dense<0.000000e+00> : vector<4x256xf32>
    %171 = tpu.matmul %168, %6, %cst_28 {dimension_numbers = #tpu.dot_dimension_numbers<[1], [0], [0], [1], [0, 0, 1, 1], [], []>} : vector<4x32xf32>, vector<32x256xf32>, vector<4x256xf32> -> vector<4x256xf32>
    %172 = vector.extract_strided_slice %5 {offsets = [12, 0], sizes = [2, 128], strides = [1, 1]} : vector<16x256xf32> to vector<2x128xf32>
    %173 = vector.extract_strided_slice %171 {offsets = [0, 0], sizes = [2, 128], strides = [1, 1]} : vector<4x256xf32> to vector<2x128xf32>
    %174 = arith.addf %172, %173 : vector<2x128xf32>
    %175 = vector.extract_strided_slice %5 {offsets = [2, 128], sizes = [2, 128], strides = [1, 1]} : vector<16x256xf32> to vector<2x128xf32>
    %176 = vector.extract_strided_slice %171 {offsets = [2, 128], sizes = [2, 128], strides = [1, 1]} : vector<4x256xf32> to vector<2x128xf32>
    %177 = arith.addf %175, %176 : vector<2x128xf32>
    %178 = tpu.concatenate %174, %177 in 0 : vector<2x128xf32>, vector<2x128xf32> -> vector<4x128xf32>
    %179 = vector.extract_strided_slice %178 {offsets = [0, 0], sizes = [4, 96], strides = [1, 1]} : vector<4x128xf32> to vector<4x96xf32>
    %180 = arith.negf %179 : vector<4x96xf32>
    %181 = math.exp %180 : vector<4x96xf32>
    %cst_29 = arith.constant 1.000000e+00 : f32
    %182 = vector.broadcast %cst_29 : f32 to vector<4x96xf32>
    %183 = arith.addf %182, %181 : vector<4x96xf32>
    %184 = arith.divf %182, %183 : vector<4x96xf32>
    %185 = vector.extract_strided_slice %184 {offsets = [0, 0], sizes = [4, 32], strides = [1, 1]} : vector<4x96xf32> to vector<4x32xf32>
    %186 = vector.extract_strided_slice %184 {offsets = [0, 32], sizes = [4, 32], strides = [1, 1]} : vector<4x96xf32> to vector<4x32xf32>
    %187 = vector.extract_strided_slice %184 {offsets = [0, 64], sizes = [4, 32], strides = [1, 1]} : vector<4x96xf32> to vector<4x32xf32>
    %188 = vector.extract_strided_slice %178 {offsets = [0, 96], sizes = [4, 32], strides = [1, 1]} : vector<4x128xf32> to vector<4x32xf32>
    %189 = math.tanh %188 : vector<4x32xf32>
    %190 = arith.mulf %186, %166 : vector<4x32xf32>
    %191 = arith.mulf %185, %189 : vector<4x32xf32>
    %192 = arith.addf %190, %191 : vector<4x32xf32>
    %193 = math.tanh %192 : vector<4x32xf32>
    %194 = arith.mulf %187, %193 : vector<4x32xf32>
    %195 = vector.extract_strided_slice %194 {offsets = [0, 0], sizes = [2, 32], strides = [1, 1]} : vector<4x32xf32> to vector<2x32xf32>
    %196 = vector.extract_strided_slice %194 {offsets = [2, 0], sizes = [2, 32], strides = [1, 1]} : vector<4x32xf32> to vector<2x32xf32>
    %cst_30 = arith.constant dense<0.000000e+00> : vector<4x256xf32>
    %197 = tpu.matmul %194, %6, %cst_30 {dimension_numbers = #tpu.dot_dimension_numbers<[1], [0], [0], [1], [0, 0, 1, 1], [], []>} : vector<4x32xf32>, vector<32x256xf32>, vector<4x256xf32> -> vector<4x256xf32>
    %198 = vector.extract_strided_slice %5 {offsets = [14, 0], sizes = [2, 128], strides = [1, 1]} : vector<16x256xf32> to vector<2x128xf32>
    %199 = vector.extract_strided_slice %197 {offsets = [0, 0], sizes = [2, 128], strides = [1, 1]} : vector<4x256xf32> to vector<2x128xf32>
    %200 = arith.addf %198, %199 : vector<2x128xf32>
    %201 = vector.extract_strided_slice %5 {offsets = [0, 128], sizes = [2, 128], strides = [1, 1]} : vector<16x256xf32> to vector<2x128xf32>
    %202 = vector.extract_strided_slice %197 {offsets = [2, 128], sizes = [2, 128], strides = [1, 1]} : vector<4x256xf32> to vector<2x128xf32>
    %203 = arith.addf %201, %202 : vector<2x128xf32>
    %204 = tpu.concatenate %200, %203 in 0 : vector<2x128xf32>, vector<2x128xf32> -> vector<4x128xf32>
    %205 = vector.extract_strided_slice %204 {offsets = [0, 0], sizes = [4, 96], strides = [1, 1]} : vector<4x128xf32> to vector<4x96xf32>
    %206 = arith.negf %205 : vector<4x96xf32>
    %207 = math.exp %206 : vector<4x96xf32>
    %cst_31 = arith.constant 1.000000e+00 : f32
    %208 = vector.broadcast %cst_31 : f32 to vector<4x96xf32>
    %209 = arith.addf %208, %207 : vector<4x96xf32>
    %210 = arith.divf %208, %209 : vector<4x96xf32>
    %211 = vector.extract_strided_slice %210 {offsets = [0, 0], sizes = [4, 32], strides = [1, 1]} : vector<4x96xf32> to vector<4x32xf32>
    %212 = vector.extract_strided_slice %210 {offsets = [0, 32], sizes = [4, 32], strides = [1, 1]} : vector<4x96xf32> to vector<4x32xf32>
    %213 = vector.extract_strided_slice %210 {offsets = [0, 64], sizes = [4, 32], strides = [1, 1]} : vector<4x96xf32> to vector<4x32xf32>
    %214 = vector.extract_strided_slice %204 {offsets = [0, 96], sizes = [4, 32], strides = [1, 1]} : vector<4x128xf32> to vector<4x32xf32>
    %215 = math.tanh %214 : vector<4x32xf32>
    %216 = arith.mulf %212, %192 : vector<4x32xf32>
    %217 = arith.mulf %211, %215 : vector<4x32xf32>
    %218 = arith.addf %216, %217 : vector<4x32xf32>
    %219 = math.tanh %218 : vector<4x32xf32>
    %220 = arith.mulf %213, %219 : vector<4x32xf32>
    %221 = vector.extract_strided_slice %220 {offsets = [0, 0], sizes = [2, 32], strides = [1, 1]} : vector<4x32xf32> to vector<2x32xf32>
    %222 = vector.extract_strided_slice %220 {offsets = [2, 0], sizes = [2, 32], strides = [1, 1]} : vector<4x32xf32> to vector<2x32xf32>
    %223 = tpu.concatenate %39, %65, %91, %117, %143, %169, %195, %221 in 0 : vector<2x32xf32>, vector<2x32xf32>, vector<2x32xf32>, vector<2x32xf32>, vector<2x32xf32>, vector<2x32xf32>, vector<2x32xf32>, vector<2x32xf32> -> vector<16x32xf32>
    %224 = tpu.concatenate %222, %196, %170, %144, %118, %92, %66, %40 in 0 : vector<2x32xf32>, vector<2x32xf32>, vector<2x32xf32>, vector<2x32xf32>, vector<2x32xf32>, vector<2x32xf32>, vector<2x32xf32>, vector<2x32xf32> -> vector<16x32xf32>
    %225 = tpu.concatenate %223, %224 in 1 : vector<16x32xf32>, vector<16x32xf32> -> vector<16x64xf32>
    %c0_32 = arith.constant 0 : index
    %c0_33 = arith.constant 0 : index
    %226 = vector.load %arg5[%c0_32, %c0_33] : memref<64x5xf32, #tpu.memory_space<vmem>>, vector<64x5xf32>
    %cst_34 = arith.constant dense<0.000000e+00> : vector<16x5xf32>
    %227 = tpu.matmul %225, %226, %cst_34 {dimension_numbers = #tpu.dot_dimension_numbers<[1], [0], [0], [1], [0, 0, 1, 1], [], []>} : vector<16x64xf32>, vector<64x5xf32>, vector<16x5xf32> -> vector<16x5xf32>
    %228 = vector.broadcast %9 : vector<1x5xf32> to vector<16x5xf32>
    %229 = arith.addf %227, %228 : vector<16x5xf32>
    %c0_35 = arith.constant 0 : index
    %c0_36 = arith.constant 0 : index
    %230 = vector.load %arg8[%c0_35, %c0_36] : memref<16x1xi32, #tpu.memory_space<vmem>>, vector<16x1xi32>
    %231 = tpu.iota {dimensions = array<i32: 1>} : vector<16x5xi32>
    %232 = vector.broadcast %230 : vector<16x1xi32> to vector<16x5xi32>
    %233 = arith.cmpi eq, %231, %232 : vector<16x5xi32>
    %234 = arith.extui %233 : vector<16x5xi1> to vector<16x5xi32>
    %235 = arith.sitofp %234 : vector<16x5xi32> to vector<16x5xf32>
    %236 = vector.extract_strided_slice %235 {offsets = [0, 0], sizes = [14, 5], strides = [1, 1]} : vector<16x5xf32> to vector<14x5xf32>
    %237 = vector.extract_strided_slice %235 {offsets = [2, 0], sizes = [14, 5], strides = [1, 1]} : vector<16x5xf32> to vector<14x5xf32>
    %238 = vector.extract_strided_slice %236 {offsets = [0, 0], sizes = [14, 1], strides = [1, 1]} : vector<14x5xf32> to vector<14x1xf32>
    %239 = vector.extract_strided_slice %7 {offsets = [0, 0], sizes = [1, 5], strides = [1, 1]} : vector<5x5xf32> to vector<1x5xf32>
    %240 = vector.broadcast %238 : vector<14x1xf32> to vector<14x5xf32>
    %241 = vector.broadcast %239 : vector<1x5xf32> to vector<14x5xf32>
    %242 = arith.mulf %240, %241 : vector<14x5xf32>
    %243 = vector.extract_strided_slice %236 {offsets = [0, 1], sizes = [14, 1], strides = [1, 1]} : vector<14x5xf32> to vector<14x1xf32>
    %244 = vector.extract_strided_slice %7 {offsets = [1, 0], sizes = [1, 5], strides = [1, 1]} : vector<5x5xf32> to vector<1x5xf32>
    %245 = vector.broadcast %243 : vector<14x1xf32> to vector<14x5xf32>
    %246 = vector.broadcast %244 : vector<1x5xf32> to vector<14x5xf32>
    %247 = arith.mulf %245, %246 : vector<14x5xf32>
    %248 = arith.addf %242, %247 : vector<14x5xf32>
    %249 = vector.extract_strided_slice %236 {offsets = [0, 2], sizes = [14, 1], strides = [1, 1]} : vector<14x5xf32> to vector<14x1xf32>
    %250 = vector.extract_strided_slice %7 {offsets = [2, 0], sizes = [1, 5], strides = [1, 1]} : vector<5x5xf32> to vector<1x5xf32>
    %251 = vector.broadcast %249 : vector<14x1xf32> to vector<14x5xf32>
    %252 = vector.broadcast %250 : vector<1x5xf32> to vector<14x5xf32>
    %253 = arith.mulf %251, %252 : vector<14x5xf32>
    %254 = arith.addf %248, %253 : vector<14x5xf32>
    %255 = vector.extract_strided_slice %236 {offsets = [0, 3], sizes = [14, 1], strides = [1, 1]} : vector<14x5xf32> to vector<14x1xf32>
    %256 = vector.extract_strided_slice %7 {offsets = [3, 0], sizes = [1, 5], strides = [1, 1]} : vector<5x5xf32> to vector<1x5xf32>
    %257 = vector.broadcast %255 : vector<14x1xf32> to vector<14x5xf32>
    %258 = vector.broadcast %256 : vector<1x5xf32> to vector<14x5xf32>
    %259 = arith.mulf %257, %258 : vector<14x5xf32>
    %260 = arith.addf %254, %259 : vector<14x5xf32>
    %261 = vector.extract_strided_slice %236 {offsets = [0, 4], sizes = [14, 1], strides = [1, 1]} : vector<14x5xf32> to vector<14x1xf32>
    %262 = vector.extract_strided_slice %7 {offsets = [4, 0], sizes = [1, 5], strides = [1, 1]} : vector<5x5xf32> to vector<1x5xf32>
    %263 = vector.broadcast %261 : vector<14x1xf32> to vector<14x5xf32>
    %264 = vector.broadcast %262 : vector<1x5xf32> to vector<14x5xf32>
    %265 = arith.mulf %263, %264 : vector<14x5xf32>
    %266 = arith.addf %260, %265 : vector<14x5xf32>
    %267 = vector.extract_strided_slice %12 {offsets = [2, 0], sizes = [14, 1], strides = [1, 1]} : vector<16x1xf32> to vector<14x1xf32>
    %cst_37 = arith.constant 0.000000e+00 : f32
    %268 = vector.broadcast %cst_37 : f32 to vector<2x1xf32>
    %269 = tpu.concatenate %267, %268 in 0 : vector<14x1xf32>, vector<2x1xf32> -> vector<16x1xf32>
    %270 = arith.subf %12, %269 : vector<16x1xf32>
    %271 = vector.extract_strided_slice %229 {offsets = [0, 0], sizes = [2, 5], strides = [1, 1]} : vector<16x5xf32> to vector<2x5xf32>
    %272 = vector.broadcast %10 : vector<1x5xf32> to vector<2x5xf32>
    %273 = arith.addf %272, %271 : vector<2x5xf32>
    %274 = vector.extract_strided_slice %235 {offsets = [0, 0], sizes = [2, 5], strides = [1, 1]} : vector<16x5xf32> to vector<2x5xf32>
    %275 = arith.mulf %273, %274 : vector<2x5xf32>
    %276 = vector.extract_strided_slice %229 {offsets = [2, 0], sizes = [14, 5], strides = [1, 1]} : vector<16x5xf32> to vector<14x5xf32>
    %277 = arith.addf %276, %266 : vector<14x5xf32>
    %278 = vector.extract_strided_slice %12 {offsets = [2, 0], sizes = [14, 1], strides = [1, 1]} : vector<16x1xf32> to vector<14x1xf32>
    %279 = vector.broadcast %278 : vector<14x1xf32> to vector<14x5xf32>
    %280 = arith.mulf %237, %279 : vector<14x5xf32>
    %281 = arith.mulf %277, %280 : vector<14x5xf32>
    %282 = tpu.concatenate %275, %281 in 0 : vector<2x5xf32>, vector<14x5xf32> -> vector<16x5xf32>
    %283 = vector.broadcast %270 : vector<16x1xf32> to vector<16x5xf32>
    %284 = vector.broadcast %11 : vector<1x5xf32> to vector<16x5xf32>
    %285 = arith.mulf %283, %284 : vector<16x5xf32>
    %286 = arith.mulf %235, %285 : vector<16x5xf32>
    %287 = arith.addf %282, %286 : vector<16x5xf32>
    %288 = vector.shape_cast %287 : vector<16x5xf32> to vector<1x16x5xf32>
    %cst_38 = arith.constant dense<0.000000e+00> : vector<1xf32>
    %289 = vector.multi_reduction <add>, %288, %cst_38 [1, 2] : vector<1x16x5xf32> to vector<1xf32>
    %290 = vector.shape_cast %289 : vector<1xf32> to vector<1x1x1xf32>
    %291 = vector.extract %290[0, 0, 0] : f32 from vector<1x1x1xf32>
    %292 = vector.broadcast %291 : f32 to vector<1x1xf32>
    %293 = vector.extract_strided_slice %229 {offsets = [0, 0], sizes = [2, 5], strides = [1, 1]} : vector<16x5xf32> to vector<2x5xf32>
    %294 = vector.broadcast %10 : vector<1x5xf32> to vector<2x5xf32>
    %295 = arith.addf %294, %293 : vector<2x5xf32>
    %296 = vector.extract_strided_slice %295 {offsets = [0, 0], sizes = [2, 1], strides = [1, 1]} : vector<2x5xf32> to vector<2x1xf32>
    %297 = vector.extract_strided_slice %7 {offsets = [0, 0], sizes = [1, 5], strides = [1, 1]} : vector<5x5xf32> to vector<1x5xf32>
    %298 = vector.broadcast %296 : vector<2x1xf32> to vector<2x5xf32>
    %299 = vector.broadcast %297 : vector<1x5xf32> to vector<2x5xf32>
    %300 = arith.addf %298, %299 : vector<2x5xf32>
    %301 = vector.extract_strided_slice %295 {offsets = [0, 1], sizes = [2, 1], strides = [1, 1]} : vector<2x5xf32> to vector<2x1xf32>
    %302 = vector.extract_strided_slice %7 {offsets = [1, 0], sizes = [1, 5], strides = [1, 1]} : vector<5x5xf32> to vector<1x5xf32>
    %303 = vector.broadcast %301 : vector<2x1xf32> to vector<2x5xf32>
    %304 = vector.broadcast %302 : vector<1x5xf32> to vector<2x5xf32>
    %305 = arith.addf %303, %304 : vector<2x5xf32>
    %306 = vector.extract_strided_slice %295 {offsets = [0, 2], sizes = [2, 1], strides = [1, 1]} : vector<2x5xf32> to vector<2x1xf32>
    %307 = vector.extract_strided_slice %7 {offsets = [2, 0], sizes = [1, 5], strides = [1, 1]} : vector<5x5xf32> to vector<1x5xf32>
    %308 = vector.broadcast %306 : vector<2x1xf32> to vector<2x5xf32>
    %309 = vector.broadcast %307 : vector<1x5xf32> to vector<2x5xf32>
    %310 = arith.addf %308, %309 : vector<2x5xf32>
    %311 = vector.extract_strided_slice %295 {offsets = [0, 3], sizes = [2, 1], strides = [1, 1]} : vector<2x5xf32> to vector<2x1xf32>
    %312 = vector.extract_strided_slice %7 {offsets = [3, 0], sizes = [1, 5], strides = [1, 1]} : vector<5x5xf32> to vector<1x5xf32>
    %313 = vector.broadcast %311 : vector<2x1xf32> to vector<2x5xf32>
    %314 = vector.broadcast %312 : vector<1x5xf32> to vector<2x5xf32>
    %315 = arith.addf %313, %314 : vector<2x5xf32>
    %316 = vector.extract_strided_slice %295 {offsets = [0, 4], sizes = [2, 1], strides = [1, 1]} : vector<2x5xf32> to vector<2x1xf32>
    %317 = vector.extract_strided_slice %7 {offsets = [4, 0], sizes = [1, 5], strides = [1, 1]} : vector<5x5xf32> to vector<1x5xf32>
    %318 = vector.broadcast %316 : vector<2x1xf32> to vector<2x5xf32>
    %319 = vector.broadcast %317 : vector<1x5xf32> to vector<2x5xf32>
    %320 = arith.addf %318, %319 : vector<2x5xf32>
    %321 = arith.maximumf %300, %305 : vector<2x5xf32>
    %322 = arith.maximumf %321, %310 : vector<2x5xf32>
    %323 = arith.maximumf %322, %315 : vector<2x5xf32>
    %324 = arith.maximumf %323, %320 : vector<2x5xf32>
    %325 = arith.subf %300, %324 : vector<2x5xf32>
    %326 = math.exp %325 : vector<2x5xf32>
    %327 = arith.subf %305, %324 : vector<2x5xf32>
    %328 = math.exp %327 : vector<2x5xf32>
    %329 = arith.addf %326, %328 : vector<2x5xf32>
    %330 = arith.subf %310, %324 : vector<2x5xf32>
    %331 = math.exp %330 : vector<2x5xf32>
    %332 = arith.addf %329, %331 : vector<2x5xf32>
    %333 = arith.subf %315, %324 : vector<2x5xf32>
    %334 = math.exp %333 : vector<2x5xf32>
    %335 = arith.addf %332, %334 : vector<2x5xf32>
    %336 = arith.subf %320, %324 : vector<2x5xf32>
    %337 = math.exp %336 : vector<2x5xf32>
    %338 = arith.addf %335, %337 : vector<2x5xf32>
    %339 = math.log %338 : vector<2x5xf32>
    %340 = arith.addf %339, %324 : vector<2x5xf32>
    %341 = vector.extract_strided_slice %229 {offsets = [2, 0], sizes = [2, 5], strides = [1, 1]} : vector<16x5xf32> to vector<2x5xf32>
    %342 = arith.addf %340, %341 : vector<2x5xf32>
    %343 = vector.extract_strided_slice %12 {offsets = [2, 0], sizes = [2, 1], strides = [1, 1]} : vector<16x1xf32> to vector<2x1xf32>
    %cst_39 = arith.constant 0.000000e+00 : f32
    %344 = vector.broadcast %cst_39 : f32 to vector<2x1xf32>
    %345 = arith.cmpf ogt, %343, %344 : vector<2x1xf32>
    %346 = vector.shape_cast %345 : vector<2x1xi1> to vector<2x1xi1>
    %347 = vector.broadcast %346 : vector<2x1xi1> to vector<2x5xi1>
    %348 = arith.select %347, %342, %295 : vector<2x5xi1>, vector<2x5xf32>
    %349 = vector.extract_strided_slice %348 {offsets = [0, 0], sizes = [2, 1], strides = [1, 1]} : vector<2x5xf32> to vector<2x1xf32>
    %350 = vector.extract_strided_slice %7 {offsets = [0, 0], sizes = [1, 5], strides = [1, 1]} : vector<5x5xf32> to vector<1x5xf32>
    %351 = vector.broadcast %349 : vector<2x1xf32> to vector<2x5xf32>
    %352 = vector.broadcast %350 : vector<1x5xf32> to vector<2x5xf32>
    %353 = arith.addf %351, %352 : vector<2x5xf32>
    %354 = vector.extract_strided_slice %348 {offsets = [0, 1], sizes = [2, 1], strides = [1, 1]} : vector<2x5xf32> to vector<2x1xf32>
    %355 = vector.extract_strided_slice %7 {offsets = [1, 0], sizes = [1, 5], strides = [1, 1]} : vector<5x5xf32> to vector<1x5xf32>
    %356 = vector.broadcast %354 : vector<2x1xf32> to vector<2x5xf32>
    %357 = vector.broadcast %355 : vector<1x5xf32> to vector<2x5xf32>
    %358 = arith.addf %356, %357 : vector<2x5xf32>
    %359 = vector.extract_strided_slice %348 {offsets = [0, 2], sizes = [2, 1], strides = [1, 1]} : vector<2x5xf32> to vector<2x1xf32>
    %360 = vector.extract_strided_slice %7 {offsets = [2, 0], sizes = [1, 5], strides = [1, 1]} : vector<5x5xf32> to vector<1x5xf32>
    %361 = vector.broadcast %359 : vector<2x1xf32> to vector<2x5xf32>
    %362 = vector.broadcast %360 : vector<1x5xf32> to vector<2x5xf32>
    %363 = arith.addf %361, %362 : vector<2x5xf32>
    %364 = vector.extract_strided_slice %348 {offsets = [0, 3], sizes = [2, 1], strides = [1, 1]} : vector<2x5xf32> to vector<2x1xf32>
    %365 = vector.extract_strided_slice %7 {offsets = [3, 0], sizes = [1, 5], strides = [1, 1]} : vector<5x5xf32> to vector<1x5xf32>
    %366 = vector.broadcast %364 : vector<2x1xf32> to vector<2x5xf32>
    %367 = vector.broadcast %365 : vector<1x5xf32> to vector<2x5xf32>
    %368 = arith.addf %366, %367 : vector<2x5xf32>
    %369 = vector.extract_strided_slice %348 {offsets = [0, 4], sizes = [2, 1], strides = [1, 1]} : vector<2x5xf32> to vector<2x1xf32>
    %370 = vector.extract_strided_slice %7 {offsets = [4, 0], sizes = [1, 5], strides = [1, 1]} : vector<5x5xf32> to vector<1x5xf32>
    %371 = vector.broadcast %369 : vector<2x1xf32> to vector<2x5xf32>
    %372 = vector.broadcast %370 : vector<1x5xf32> to vector<2x5xf32>
    %373 = arith.addf %371, %372 : vector<2x5xf32>
    %374 = arith.maximumf %353, %358 : vector<2x5xf32>
    %375 = arith.maximumf %374, %363 : vector<2x5xf32>
    %376 = arith.maximumf %375, %368 : vector<2x5xf32>
    %377 = arith.maximumf %376, %373 : vector<2x5xf32>
    %378 = arith.subf %353, %377 : vector<2x5xf32>
    %379 = math.exp %378 : vector<2x5xf32>
    %380 = arith.subf %358, %377 : vector<2x5xf32>
    %381 = math.exp %380 : vector<2x5xf32>
    %382 = arith.addf %379, %381 : vector<2x5xf32>
    %383 = arith.subf %363, %377 : vector<2x5xf32>
    %384 = math.exp %383 : vector<2x5xf32>
    %385 = arith.addf %382, %384 : vector<2x5xf32>
    %386 = arith.subf %368, %377 : vector<2x5xf32>
    %387 = math.exp %386 : vector<2x5xf32>
    %388 = arith.addf %385, %387 : vector<2x5xf32>
    %389 = arith.subf %373, %377 : vector<2x5xf32>
    %390 = math.exp %389 : vector<2x5xf32>
    %391 = arith.addf %388, %390 : vector<2x5xf32>
    %392 = math.log %391 : vector<2x5xf32>
    %393 = arith.addf %392, %377 : vector<2x5xf32>
    %394 = vector.extract_strided_slice %229 {offsets = [4, 0], sizes = [2, 5], strides = [1, 1]} : vector<16x5xf32> to vector<2x5xf32>
    %395 = arith.addf %393, %394 : vector<2x5xf32>
    %396 = vector.extract_strided_slice %12 {offsets = [4, 0], sizes = [2, 1], strides = [1, 1]} : vector<16x1xf32> to vector<2x1xf32>
    %cst_40 = arith.constant 0.000000e+00 : f32
    %397 = vector.broadcast %cst_40 : f32 to vector<2x1xf32>
    %398 = arith.cmpf ogt, %396, %397 : vector<2x1xf32>
    %399 = vector.shape_cast %398 : vector<2x1xi1> to vector<2x1xi1>
    %400 = vector.broadcast %399 : vector<2x1xi1> to vector<2x5xi1>
    %401 = arith.select %400, %395, %348 : vector<2x5xi1>, vector<2x5xf32>
    %402 = vector.extract_strided_slice %401 {offsets = [0, 0], sizes = [2, 1], strides = [1, 1]} : vector<2x5xf32> to vector<2x1xf32>
    %403 = vector.extract_strided_slice %7 {offsets = [0, 0], sizes = [1, 5], strides = [1, 1]} : vector<5x5xf32> to vector<1x5xf32>
    %404 = vector.broadcast %402 : vector<2x1xf32> to vector<2x5xf32>
    %405 = vector.broadcast %403 : vector<1x5xf32> to vector<2x5xf32>
    %406 = arith.addf %404, %405 : vector<2x5xf32>
    %407 = vector.extract_strided_slice %401 {offsets = [0, 1], sizes = [2, 1], strides = [1, 1]} : vector<2x5xf32> to vector<2x1xf32>
    %408 = vector.extract_strided_slice %7 {offsets = [1, 0], sizes = [1, 5], strides = [1, 1]} : vector<5x5xf32> to vector<1x5xf32>
    %409 = vector.broadcast %407 : vector<2x1xf32> to vector<2x5xf32>
    %410 = vector.broadcast %408 : vector<1x5xf32> to vector<2x5xf32>
    %411 = arith.addf %409, %410 : vector<2x5xf32>
    %412 = vector.extract_strided_slice %401 {offsets = [0, 2], sizes = [2, 1], strides = [1, 1]} : vector<2x5xf32> to vector<2x1xf32>
    %413 = vector.extract_strided_slice %7 {offsets = [2, 0], sizes = [1, 5], strides = [1, 1]} : vector<5x5xf32> to vector<1x5xf32>
    %414 = vector.broadcast %412 : vector<2x1xf32> to vector<2x5xf32>
    %415 = vector.broadcast %413 : vector<1x5xf32> to vector<2x5xf32>
    %416 = arith.addf %414, %415 : vector<2x5xf32>
    %417 = vector.extract_strided_slice %401 {offsets = [0, 3], sizes = [2, 1], strides = [1, 1]} : vector<2x5xf32> to vector<2x1xf32>
    %418 = vector.extract_strided_slice %7 {offsets = [3, 0], sizes = [1, 5], strides = [1, 1]} : vector<5x5xf32> to vector<1x5xf32>
    %419 = vector.broadcast %417 : vector<2x1xf32> to vector<2x5xf32>
    %420 = vector.broadcast %418 : vector<1x5xf32> to vector<2x5xf32>
    %421 = arith.addf %419, %420 : vector<2x5xf32>
    %422 = vector.extract_strided_slice %401 {offsets = [0, 4], sizes = [2, 1], strides = [1, 1]} : vector<2x5xf32> to vector<2x1xf32>
    %423 = vector.extract_strided_slice %7 {offsets = [4, 0], sizes = [1, 5], strides = [1, 1]} : vector<5x5xf32> to vector<1x5xf32>
    %424 = vector.broadcast %422 : vector<2x1xf32> to vector<2x5xf32>
    %425 = vector.broadcast %423 : vector<1x5xf32> to vector<2x5xf32>
    %426 = arith.addf %424, %425 : vector<2x5xf32>
    %427 = arith.maximumf %406, %411 : vector<2x5xf32>
    %428 = arith.maximumf %427, %416 : vector<2x5xf32>
    %429 = arith.maximumf %428, %421 : vector<2x5xf32>
    %430 = arith.maximumf %429, %426 : vector<2x5xf32>
    %431 = arith.subf %406, %430 : vector<2x5xf32>
    %432 = math.exp %431 : vector<2x5xf32>
    %433 = arith.subf %411, %430 : vector<2x5xf32>
    %434 = math.exp %433 : vector<2x5xf32>
    %435 = arith.addf %432, %434 : vector<2x5xf32>
    %436 = arith.subf %416, %430 : vector<2x5xf32>
    %437 = math.exp %436 : vector<2x5xf32>
    %438 = arith.addf %435, %437 : vector<2x5xf32>
    %439 = arith.subf %421, %430 : vector<2x5xf32>
    %440 = math.exp %439 : vector<2x5xf32>
    %441 = arith.addf %438, %440 : vector<2x5xf32>
    %442 = arith.subf %426, %430 : vector<2x5xf32>
    %443 = math.exp %442 : vector<2x5xf32>
    %444 = arith.addf %441, %443 : vector<2x5xf32>
    %445 = math.log %444 : vector<2x5xf32>
    %446 = arith.addf %445, %430 : vector<2x5xf32>
    %447 = vector.extract_strided_slice %229 {offsets = [6, 0], sizes = [2, 5], strides = [1, 1]} : vector<16x5xf32> to vector<2x5xf32>
    %448 = arith.addf %446, %447 : vector<2x5xf32>
    %449 = vector.extract_strided_slice %12 {offsets = [6, 0], sizes = [2, 1], strides = [1, 1]} : vector<16x1xf32> to vector<2x1xf32>
    %cst_41 = arith.constant 0.000000e+00 : f32
    %450 = vector.broadcast %cst_41 : f32 to vector<2x1xf32>
    %451 = arith.cmpf ogt, %449, %450 : vector<2x1xf32>
    %452 = vector.shape_cast %451 : vector<2x1xi1> to vector<2x1xi1>
    %453 = vector.broadcast %452 : vector<2x1xi1> to vector<2x5xi1>
    %454 = arith.select %453, %448, %401 : vector<2x5xi1>, vector<2x5xf32>
    %455 = vector.extract_strided_slice %454 {offsets = [0, 0], sizes = [2, 1], strides = [1, 1]} : vector<2x5xf32> to vector<2x1xf32>
    %456 = vector.extract_strided_slice %7 {offsets = [0, 0], sizes = [1, 5], strides = [1, 1]} : vector<5x5xf32> to vector<1x5xf32>
    %457 = vector.broadcast %455 : vector<2x1xf32> to vector<2x5xf32>
    %458 = vector.broadcast %456 : vector<1x5xf32> to vector<2x5xf32>
    %459 = arith.addf %457, %458 : vector<2x5xf32>
    %460 = vector.extract_strided_slice %454 {offsets = [0, 1], sizes = [2, 1], strides = [1, 1]} : vector<2x5xf32> to vector<2x1xf32>
    %461 = vector.extract_strided_slice %7 {offsets = [1, 0], sizes = [1, 5], strides = [1, 1]} : vector<5x5xf32> to vector<1x5xf32>
    %462 = vector.broadcast %460 : vector<2x1xf32> to vector<2x5xf32>
    %463 = vector.broadcast %461 : vector<1x5xf32> to vector<2x5xf32>
    %464 = arith.addf %462, %463 : vector<2x5xf32>
    %465 = vector.extract_strided_slice %454 {offsets = [0, 2], sizes = [2, 1], strides = [1, 1]} : vector<2x5xf32> to vector<2x1xf32>
    %466 = vector.extract_strided_slice %7 {offsets = [2, 0], sizes = [1, 5], strides = [1, 1]} : vector<5x5xf32> to vector<1x5xf32>
    %467 = vector.broadcast %465 : vector<2x1xf32> to vector<2x5xf32>
    %468 = vector.broadcast %466 : vector<1x5xf32> to vector<2x5xf32>
    %469 = arith.addf %467, %468 : vector<2x5xf32>
    %470 = vector.extract_strided_slice %454 {offsets = [0, 3], sizes = [2, 1], strides = [1, 1]} : vector<2x5xf32> to vector<2x1xf32>
    %471 = vector.extract_strided_slice %7 {offsets = [3, 0], sizes = [1, 5], strides = [1, 1]} : vector<5x5xf32> to vector<1x5xf32>
    %472 = vector.broadcast %470 : vector<2x1xf32> to vector<2x5xf32>
    %473 = vector.broadcast %471 : vector<1x5xf32> to vector<2x5xf32>
    %474 = arith.addf %472, %473 : vector<2x5xf32>
    %475 = vector.extract_strided_slice %454 {offsets = [0, 4], sizes = [2, 1], strides = [1, 1]} : vector<2x5xf32> to vector<2x1xf32>
    %476 = vector.extract_strided_slice %7 {offsets = [4, 0], sizes = [1, 5], strides = [1, 1]} : vector<5x5xf32> to vector<1x5xf32>
    %477 = vector.broadcast %475 : vector<2x1xf32> to vector<2x5xf32>
    %478 = vector.broadcast %476 : vector<1x5xf32> to vector<2x5xf32>
    %479 = arith.addf %477, %478 : vector<2x5xf32>
    %480 = arith.maximumf %459, %464 : vector<2x5xf32>
    %481 = arith.maximumf %480, %469 : vector<2x5xf32>
    %482 = arith.maximumf %481, %474 : vector<2x5xf32>
    %483 = arith.maximumf %482, %479 : vector<2x5xf32>
    %484 = arith.subf %459, %483 : vector<2x5xf32>
    %485 = math.exp %484 : vector<2x5xf32>
    %486 = arith.subf %464, %483 : vector<2x5xf32>
    %487 = math.exp %486 : vector<2x5xf32>
    %488 = arith.addf %485, %487 : vector<2x5xf32>
    %489 = arith.subf %469, %483 : vector<2x5xf32>
    %490 = math.exp %489 : vector<2x5xf32>
    %491 = arith.addf %488, %490 : vector<2x5xf32>
    %492 = arith.subf %474, %483 : vector<2x5xf32>
    %493 = math.exp %492 : vector<2x5xf32>
    %494 = arith.addf %491, %493 : vector<2x5xf32>
    %495 = arith.subf %479, %483 : vector<2x5xf32>
    %496 = math.exp %495 : vector<2x5xf32>
    %497 = arith.addf %494, %496 : vector<2x5xf32>
    %498 = math.log %497 : vector<2x5xf32>
    %499 = arith.addf %498, %483 : vector<2x5xf32>
    %500 = vector.extract_strided_slice %229 {offsets = [8, 0], sizes = [2, 5], strides = [1, 1]} : vector<16x5xf32> to vector<2x5xf32>
    %501 = arith.addf %499, %500 : vector<2x5xf32>
    %502 = vector.extract_strided_slice %12 {offsets = [8, 0], sizes = [2, 1], strides = [1, 1]} : vector<16x1xf32> to vector<2x1xf32>
    %cst_42 = arith.constant 0.000000e+00 : f32
    %503 = vector.broadcast %cst_42 : f32 to vector<2x1xf32>
    %504 = arith.cmpf ogt, %502, %503 : vector<2x1xf32>
    %505 = vector.shape_cast %504 : vector<2x1xi1> to vector<2x1xi1>
    %506 = vector.broadcast %505 : vector<2x1xi1> to vector<2x5xi1>
    %507 = arith.select %506, %501, %454 : vector<2x5xi1>, vector<2x5xf32>
    %508 = vector.extract_strided_slice %507 {offsets = [0, 0], sizes = [2, 1], strides = [1, 1]} : vector<2x5xf32> to vector<2x1xf32>
    %509 = vector.extract_strided_slice %7 {offsets = [0, 0], sizes = [1, 5], strides = [1, 1]} : vector<5x5xf32> to vector<1x5xf32>
    %510 = vector.broadcast %508 : vector<2x1xf32> to vector<2x5xf32>
    %511 = vector.broadcast %509 : vector<1x5xf32> to vector<2x5xf32>
    %512 = arith.addf %510, %511 : vector<2x5xf32>
    %513 = vector.extract_strided_slice %507 {offsets = [0, 1], sizes = [2, 1], strides = [1, 1]} : vector<2x5xf32> to vector<2x1xf32>
    %514 = vector.extract_strided_slice %7 {offsets = [1, 0], sizes = [1, 5], strides = [1, 1]} : vector<5x5xf32> to vector<1x5xf32>
    %515 = vector.broadcast %513 : vector<2x1xf32> to vector<2x5xf32>
    %516 = vector.broadcast %514 : vector<1x5xf32> to vector<2x5xf32>
    %517 = arith.addf %515, %516 : vector<2x5xf32>
    %518 = vector.extract_strided_slice %507 {offsets = [0, 2], sizes = [2, 1], strides = [1, 1]} : vector<2x5xf32> to vector<2x1xf32>
    %519 = vector.extract_strided_slice %7 {offsets = [2, 0], sizes = [1, 5], strides = [1, 1]} : vector<5x5xf32> to vector<1x5xf32>
    %520 = vector.broadcast %518 : vector<2x1xf32> to vector<2x5xf32>
    %521 = vector.broadcast %519 : vector<1x5xf32> to vector<2x5xf32>
    %522 = arith.addf %520, %521 : vector<2x5xf32>
    %523 = vector.extract_strided_slice %507 {offsets = [0, 3], sizes = [2, 1], strides = [1, 1]} : vector<2x5xf32> to vector<2x1xf32>
    %524 = vector.extract_strided_slice %7 {offsets = [3, 0], sizes = [1, 5], strides = [1, 1]} : vector<5x5xf32> to vector<1x5xf32>
    %525 = vector.broadcast %523 : vector<2x1xf32> to vector<2x5xf32>
    %526 = vector.broadcast %524 : vector<1x5xf32> to vector<2x5xf32>
    %527 = arith.addf %525, %526 : vector<2x5xf32>
    %528 = vector.extract_strided_slice %507 {offsets = [0, 4], sizes = [2, 1], strides = [1, 1]} : vector<2x5xf32> to vector<2x1xf32>
    %529 = vector.extract_strided_slice %7 {offsets = [4, 0], sizes = [1, 5], strides = [1, 1]} : vector<5x5xf32> to vector<1x5xf32>
    %530 = vector.broadcast %528 : vector<2x1xf32> to vector<2x5xf32>
    %531 = vector.broadcast %529 : vector<1x5xf32> to vector<2x5xf32>
    %532 = arith.addf %530, %531 : vector<2x5xf32>
    %533 = arith.maximumf %512, %517 : vector<2x5xf32>
    %534 = arith.maximumf %533, %522 : vector<2x5xf32>
    %535 = arith.maximumf %534, %527 : vector<2x5xf32>
    %536 = arith.maximumf %535, %532 : vector<2x5xf32>
    %537 = arith.subf %512, %536 : vector<2x5xf32>
    %538 = math.exp %537 : vector<2x5xf32>
    %539 = arith.subf %517, %536 : vector<2x5xf32>
    %540 = math.exp %539 : vector<2x5xf32>
    %541 = arith.addf %538, %540 : vector<2x5xf32>
    %542 = arith.subf %522, %536 : vector<2x5xf32>
    %543 = math.exp %542 : vector<2x5xf32>
    %544 = arith.addf %541, %543 : vector<2x5xf32>
    %545 = arith.subf %527, %536 : vector<2x5xf32>
    %546 = math.exp %545 : vector<2x5xf32>
    %547 = arith.addf %544, %546 : vector<2x5xf32>
    %548 = arith.subf %532, %536 : vector<2x5xf32>
    %549 = math.exp %548 : vector<2x5xf32>
    %550 = arith.addf %547, %549 : vector<2x5xf32>
    %551 = math.log %550 : vector<2x5xf32>
    %552 = arith.addf %551, %536 : vector<2x5xf32>
    %553 = vector.extract_strided_slice %229 {offsets = [10, 0], sizes = [2, 5], strides = [1, 1]} : vector<16x5xf32> to vector<2x5xf32>
    %554 = arith.addf %552, %553 : vector<2x5xf32>
    %555 = vector.extract_strided_slice %12 {offsets = [10, 0], sizes = [2, 1], strides = [1, 1]} : vector<16x1xf32> to vector<2x1xf32>
    %cst_43 = arith.constant 0.000000e+00 : f32
    %556 = vector.broadcast %cst_43 : f32 to vector<2x1xf32>
    %557 = arith.cmpf ogt, %555, %556 : vector<2x1xf32>
    %558 = vector.shape_cast %557 : vector<2x1xi1> to vector<2x1xi1>
    %559 = vector.broadcast %558 : vector<2x1xi1> to vector<2x5xi1>
    %560 = arith.select %559, %554, %507 : vector<2x5xi1>, vector<2x5xf32>
    %561 = vector.extract_strided_slice %560 {offsets = [0, 0], sizes = [2, 1], strides = [1, 1]} : vector<2x5xf32> to vector<2x1xf32>
    %562 = vector.extract_strided_slice %7 {offsets = [0, 0], sizes = [1, 5], strides = [1, 1]} : vector<5x5xf32> to vector<1x5xf32>
    %563 = vector.broadcast %561 : vector<2x1xf32> to vector<2x5xf32>
    %564 = vector.broadcast %562 : vector<1x5xf32> to vector<2x5xf32>
    %565 = arith.addf %563, %564 : vector<2x5xf32>
    %566 = vector.extract_strided_slice %560 {offsets = [0, 1], sizes = [2, 1], strides = [1, 1]} : vector<2x5xf32> to vector<2x1xf32>
    %567 = vector.extract_strided_slice %7 {offsets = [1, 0], sizes = [1, 5], strides = [1, 1]} : vector<5x5xf32> to vector<1x5xf32>
    %568 = vector.broadcast %566 : vector<2x1xf32> to vector<2x5xf32>
    %569 = vector.broadcast %567 : vector<1x5xf32> to vector<2x5xf32>
    %570 = arith.addf %568, %569 : vector<2x5xf32>
    %571 = vector.extract_strided_slice %560 {offsets = [0, 2], sizes = [2, 1], strides = [1, 1]} : vector<2x5xf32> to vector<2x1xf32>
    %572 = vector.extract_strided_slice %7 {offsets = [2, 0], sizes = [1, 5], strides = [1, 1]} : vector<5x5xf32> to vector<1x5xf32>
    %573 = vector.broadcast %571 : vector<2x1xf32> to vector<2x5xf32>
    %574 = vector.broadcast %572 : vector<1x5xf32> to vector<2x5xf32>
    %575 = arith.addf %573, %574 : vector<2x5xf32>
    %576 = vector.extract_strided_slice %560 {offsets = [0, 3], sizes = [2, 1], strides = [1, 1]} : vector<2x5xf32> to vector<2x1xf32>
    %577 = vector.extract_strided_slice %7 {offsets = [3, 0], sizes = [1, 5], strides = [1, 1]} : vector<5x5xf32> to vector<1x5xf32>
    %578 = vector.broadcast %576 : vector<2x1xf32> to vector<2x5xf32>
    %579 = vector.broadcast %577 : vector<1x5xf32> to vector<2x5xf32>
    %580 = arith.addf %578, %579 : vector<2x5xf32>
    %581 = vector.extract_strided_slice %560 {offsets = [0, 4], sizes = [2, 1], strides = [1, 1]} : vector<2x5xf32> to vector<2x1xf32>
    %582 = vector.extract_strided_slice %7 {offsets = [4, 0], sizes = [1, 5], strides = [1, 1]} : vector<5x5xf32> to vector<1x5xf32>
    %583 = vector.broadcast %581 : vector<2x1xf32> to vector<2x5xf32>
    %584 = vector.broadcast %582 : vector<1x5xf32> to vector<2x5xf32>
    %585 = arith.addf %583, %584 : vector<2x5xf32>
    %586 = arith.maximumf %565, %570 : vector<2x5xf32>
    %587 = arith.maximumf %586, %575 : vector<2x5xf32>
    %588 = arith.maximumf %587, %580 : vector<2x5xf32>
    %589 = arith.maximumf %588, %585 : vector<2x5xf32>
    %590 = arith.subf %565, %589 : vector<2x5xf32>
    %591 = math.exp %590 : vector<2x5xf32>
    %592 = arith.subf %570, %589 : vector<2x5xf32>
    %593 = math.exp %592 : vector<2x5xf32>
    %594 = arith.addf %591, %593 : vector<2x5xf32>
    %595 = arith.subf %575, %589 : vector<2x5xf32>
    %596 = math.exp %595 : vector<2x5xf32>
    %597 = arith.addf %594, %596 : vector<2x5xf32>
    %598 = arith.subf %580, %589 : vector<2x5xf32>
    %599 = math.exp %598 : vector<2x5xf32>
    %600 = arith.addf %597, %599 : vector<2x5xf32>
    %601 = arith.subf %585, %589 : vector<2x5xf32>
    %602 = math.exp %601 : vector<2x5xf32>
    %603 = arith.addf %600, %602 : vector<2x5xf32>
    %604 = math.log %603 : vector<2x5xf32>
    %605 = arith.addf %604, %589 : vector<2x5xf32>
    %606 = vector.extract_strided_slice %229 {offsets = [12, 0], sizes = [2, 5], strides = [1, 1]} : vector<16x5xf32> to vector<2x5xf32>
    %607 = arith.addf %605, %606 : vector<2x5xf32>
    %608 = vector.extract_strided_slice %12 {offsets = [12, 0], sizes = [2, 1], strides = [1, 1]} : vector<16x1xf32> to vector<2x1xf32>
    %cst_44 = arith.constant 0.000000e+00 : f32
    %609 = vector.broadcast %cst_44 : f32 to vector<2x1xf32>
    %610 = arith.cmpf ogt, %608, %609 : vector<2x1xf32>
    %611 = vector.shape_cast %610 : vector<2x1xi1> to vector<2x1xi1>
    %612 = vector.broadcast %611 : vector<2x1xi1> to vector<2x5xi1>
    %613 = arith.select %612, %607, %560 : vector<2x5xi1>, vector<2x5xf32>
    %614 = vector.extract_strided_slice %613 {offsets = [0, 0], sizes = [2, 1], strides = [1, 1]} : vector<2x5xf32> to vector<2x1xf32>
    %615 = vector.extract_strided_slice %7 {offsets = [0, 0], sizes = [1, 5], strides = [1, 1]} : vector<5x5xf32> to vector<1x5xf32>
    %616 = vector.broadcast %614 : vector<2x1xf32> to vector<2x5xf32>
    %617 = vector.broadcast %615 : vector<1x5xf32> to vector<2x5xf32>
    %618 = arith.addf %616, %617 : vector<2x5xf32>
    %619 = vector.extract_strided_slice %613 {offsets = [0, 1], sizes = [2, 1], strides = [1, 1]} : vector<2x5xf32> to vector<2x1xf32>
    %620 = vector.extract_strided_slice %7 {offsets = [1, 0], sizes = [1, 5], strides = [1, 1]} : vector<5x5xf32> to vector<1x5xf32>
    %621 = vector.broadcast %619 : vector<2x1xf32> to vector<2x5xf32>
    %622 = vector.broadcast %620 : vector<1x5xf32> to vector<2x5xf32>
    %623 = arith.addf %621, %622 : vector<2x5xf32>
    %624 = vector.extract_strided_slice %613 {offsets = [0, 2], sizes = [2, 1], strides = [1, 1]} : vector<2x5xf32> to vector<2x1xf32>
    %625 = vector.extract_strided_slice %7 {offsets = [2, 0], sizes = [1, 5], strides = [1, 1]} : vector<5x5xf32> to vector<1x5xf32>
    %626 = vector.broadcast %624 : vector<2x1xf32> to vector<2x5xf32>
    %627 = vector.broadcast %625 : vector<1x5xf32> to vector<2x5xf32>
    %628 = arith.addf %626, %627 : vector<2x5xf32>
    %629 = vector.extract_strided_slice %613 {offsets = [0, 3], sizes = [2, 1], strides = [1, 1]} : vector<2x5xf32> to vector<2x1xf32>
    %630 = vector.extract_strided_slice %7 {offsets = [3, 0], sizes = [1, 5], strides = [1, 1]} : vector<5x5xf32> to vector<1x5xf32>
    %631 = vector.broadcast %629 : vector<2x1xf32> to vector<2x5xf32>
    %632 = vector.broadcast %630 : vector<1x5xf32> to vector<2x5xf32>
    %633 = arith.addf %631, %632 : vector<2x5xf32>
    %634 = vector.extract_strided_slice %613 {offsets = [0, 4], sizes = [2, 1], strides = [1, 1]} : vector<2x5xf32> to vector<2x1xf32>
    %635 = vector.extract_strided_slice %7 {offsets = [4, 0], sizes = [1, 5], strides = [1, 1]} : vector<5x5xf32> to vector<1x5xf32>
    %636 = vector.broadcast %634 : vector<2x1xf32> to vector<2x5xf32>
    %637 = vector.broadcast %635 : vector<1x5xf32> to vector<2x5xf32>
    %638 = arith.addf %636, %637 : vector<2x5xf32>
    %639 = arith.maximumf %618, %623 : vector<2x5xf32>
    %640 = arith.maximumf %639, %628 : vector<2x5xf32>
    %641 = arith.maximumf %640, %633 : vector<2x5xf32>
    %642 = arith.maximumf %641, %638 : vector<2x5xf32>
    %643 = arith.subf %618, %642 : vector<2x5xf32>
    %644 = math.exp %643 : vector<2x5xf32>
    %645 = arith.subf %623, %642 : vector<2x5xf32>
    %646 = math.exp %645 : vector<2x5xf32>
    %647 = arith.addf %644, %646 : vector<2x5xf32>
    %648 = arith.subf %628, %642 : vector<2x5xf32>
    %649 = math.exp %648 : vector<2x5xf32>
    %650 = arith.addf %647, %649 : vector<2x5xf32>
    %651 = arith.subf %633, %642 : vector<2x5xf32>
    %652 = math.exp %651 : vector<2x5xf32>
    %653 = arith.addf %650, %652 : vector<2x5xf32>
    %654 = arith.subf %638, %642 : vector<2x5xf32>
    %655 = math.exp %654 : vector<2x5xf32>
    %656 = arith.addf %653, %655 : vector<2x5xf32>
    %657 = math.log %656 : vector<2x5xf32>
    %658 = arith.addf %657, %642 : vector<2x5xf32>
    %659 = vector.extract_strided_slice %229 {offsets = [14, 0], sizes = [2, 5], strides = [1, 1]} : vector<16x5xf32> to vector<2x5xf32>
    %660 = arith.addf %658, %659 : vector<2x5xf32>
    %661 = vector.extract_strided_slice %12 {offsets = [14, 0], sizes = [2, 1], strides = [1, 1]} : vector<16x1xf32> to vector<2x1xf32>
    %cst_45 = arith.constant 0.000000e+00 : f32
    %662 = vector.broadcast %cst_45 : f32 to vector<2x1xf32>
    %663 = arith.cmpf ogt, %661, %662 : vector<2x1xf32>
    %664 = vector.shape_cast %663 : vector<2x1xi1> to vector<2x1xi1>
    %665 = vector.broadcast %664 : vector<2x1xi1> to vector<2x5xi1>
    %666 = arith.select %665, %660, %613 : vector<2x5xi1>, vector<2x5xf32>
    %667 = vector.broadcast %11 : vector<1x5xf32> to vector<2x5xf32>
    %668 = arith.addf %666, %667 : vector<2x5xf32>
    %cst_46 = arith.constant dense<0xFF800000> : vector<2xf32>
    %669 = vector.multi_reduction <maximumf>, %668, %cst_46 [1] : vector<2x5xf32> to vector<2xf32>
    %670 = vector.shape_cast %669 : vector<2xf32> to vector<2x1xf32>
    %671 = vector.broadcast %670 : vector<2x1xf32> to vector<2x5xf32>
    %672 = arith.subf %668, %671 : vector<2x5xf32>
    %673 = math.exp %672 : vector<2x5xf32>
    %cst_47 = arith.constant dense<0.000000e+00> : vector<2xf32>
    %674 = vector.multi_reduction <add>, %673, %cst_47 [1] : vector<2x5xf32> to vector<2xf32>
    %675 = vector.shape_cast %674 : vector<2xf32> to vector<2x1xf32>
    %676 = math.log %675 : vector<2x1xf32>
    %677 = arith.addf %676, %670 : vector<2x1xf32>
    %678 = vector.shape_cast %677 : vector<2x1xf32> to vector<1x2x1xf32>
    %cst_48 = arith.constant dense<0.000000e+00> : vector<1xf32>
    %679 = vector.multi_reduction <add>, %678, %cst_48 [1, 2] : vector<1x2x1xf32> to vector<1xf32>
    %680 = vector.shape_cast %679 : vector<1xf32> to vector<1x1x1xf32>
    %681 = vector.extract %680[0, 0, 0] : f32 from vector<1x1x1xf32>
    %682 = vector.broadcast %681 : f32 to vector<1x1xf32>
    %683 = arith.subf %682, %292 : vector<1x1xf32>
    %cst_49 = arith.constant 5.000000e-01 : f32
    %684 = vector.broadcast %cst_49 : f32 to vector<1x1xf32>
    %685 = arith.mulf %683, %684 : vector<1x1xf32>
    %c0_50 = arith.constant 0 : index
    %c0_51 = arith.constant 0 : index
    %686 = vector.load %arg10[%c0_50, %c0_51] : memref<1x1xf32, #tpu.memory_space<vmem>>, vector<1x1xf32>
    tpu.vector_store %arg10[%c0_50, %c0_51], %685 {strides = array<i32>} : memref<1x1xf32, #tpu.memory_space<vmem>>, vector<1x1xf32>,
    return
  }
}

</mosaic_0001>

<llo_original>
// kernel: bilstm_crf_loss.1
$region0: #{bilstm_crf_loss.1}
  #allocation0 [shape = 'u32[]', space=smem, size = 0x4, offset = 0x4, fixed_abs, tag = 'smem constant byte address 0x4 - core index']
  #allocation1 [shape = 'u32[144,128]{1,0:T(1,128)}', space=vmem, size = 0x12000, scoped, tag = 'internal scratch']
  %s0 = inlined_call_operand.vmem [shape: f32[16,16], index: 0, kind: input, shape index: {}]
  %s1 = inlined_call_operand.vmem [shape: f32[16,256], index: 1, kind: input, shape index: {}]
  %s2 = inlined_call_operand.vmem [shape: f32[32,256], index: 2, kind: input, shape index: {}]
  %s3 = inlined_call_operand.vmem [shape: f32[1,256], index: 3, kind: input, shape index: {}]
  %s4 = inlined_call_operand.vmem [shape: f32[8,32], index: 4, kind: input, shape index: {}]
  %s5 = inlined_call_operand.vmem [shape: f32[64,5], index: 5, kind: input, shape index: {}]
  %s6 = inlined_call_operand.vmem [shape: f32[3,5], index: 6, kind: input, shape index: {}]
  %s7 = inlined_call_operand.vmem [shape: f32[5,5], index: 7, kind: input, shape index: {}]
  %s8 = inlined_call_operand.vmem [shape: s32[16,1], index: 8, kind: input, shape index: {}]
  %s9 = inlined_call_operand.vmem [shape: f32[16,1], index: 9, kind: input, shape index: {}]
  %s10 = inlined_call_operand.hbm [shape: f32[1,1], index: 10, kind: output, shape index: {}]
  %s11 = sld [smem:[#allocation0]]
  $region50: #{bilstm_crf_loss.1} parent=0
    _
  %s13 = ssub.s32 1, %s11
  %s14 = scalar_select 0, %s13, %s11
  $region1: #{bilstm_crf_loss.1} parent=0
    #allocation2 [shape = 'u8[512]{0}', space=vmem, size = 0x400, scoped, tag = 'output window, operand 0, single buffered']
    #allocation3 [shape = 's32[1]{0}', space=sflag, size = 0x4, scoped, tag = 'scoped memory for bilstm_crf_loss.1']
    %15 = vsyncpa [#allocation3], 0
    // Predicated region
    $region2: #{bilstm_crf_loss.1} parent=1 // pred_check
      _
    $region3: #{bilstm_crf_loss.1} parent=1 // pred_check_branch
      %17 = sbr.rel (0) target = $region5
    $region4: #{bilstm_crf_loss.1} parent=1 // pred_region
      _
    $region5: #{bilstm_crf_loss.1} parent=1 // pred_fallthru
      _
    // Predicated region
    $region6: #{bilstm_crf_loss.1} parent=1 // pred_check
      _
    $region7: #{bilstm_crf_loss.1} parent=1 // pred_check_branch
      %19 = sbr.rel (0) target = $region9
    $region8: #{bilstm_crf_loss.1} parent=1 // pred_region
      _
    $region9: #{bilstm_crf_loss.1} parent=1 // pred_fallthru
      _
    // Predicated region
    $region10: #{bilstm_crf_loss.1} parent=1 // pred_check
      _
    $region11: #{bilstm_crf_loss.1} parent=1 // pred_check_branch
      %21 = sbr.rel (0) target = $region13
    $region12: #{bilstm_crf_loss.1} parent=1 // pred_region
      _
    $region13: #{bilstm_crf_loss.1} parent=1 // pred_fallthru
      _
    // Predicated region
    $region14: #{bilstm_crf_loss.1} parent=1 // pred_check
      _
    $region15: #{bilstm_crf_loss.1} parent=1 // pred_check_branch
      %23 = sbr.rel (0) target = $region17
    $region16: #{bilstm_crf_loss.1} parent=1 // pred_region
      _
    $region17: #{bilstm_crf_loss.1} parent=1 // pred_fallthru
      _
    // Predicated region
    $region18: #{bilstm_crf_loss.1} parent=1 // pred_check
      _
    $region19: #{bilstm_crf_loss.1} parent=1 // pred_check_branch
      %25 = sbr.rel (0) target = $region21
    $region20: #{bilstm_crf_loss.1} parent=1 // pred_region
      _
    $region21: #{bilstm_crf_loss.1} parent=1 // pred_fallthru
      _
    // Predicated region
    $region22: #{bilstm_crf_loss.1} parent=1 // pred_check
      _
    $region23: #{bilstm_crf_loss.1} parent=1 // pred_check_branch
      %27 = sbr.rel (0) target = $region25
    $region24: #{bilstm_crf_loss.1} parent=1 // pred_region
      _
    $region25: #{bilstm_crf_loss.1} parent=1 // pred_fallthru
      _
    // Predicated region
    $region26: #{bilstm_crf_loss.1} parent=1 // pred_check
      _
    $region27: #{bilstm_crf_loss.1} parent=1 // pred_check_branch
      %29 = sbr.rel (0) target = $region29
    $region28: #{bilstm_crf_loss.1} parent=1 // pred_region
      _
    $region29: #{bilstm_crf_loss.1} parent=1 // pred_fallthru
      _
    // Predicated region
    $region30: #{bilstm_crf_loss.1} parent=1 // pred_check
      _
    $region31: #{bilstm_crf_loss.1} parent=1 // pred_check_branch
      %31 = sbr.rel (0) target = $region33
    $region32: #{bilstm_crf_loss.1} parent=1 // pred_region
      _
    $region33: #{bilstm_crf_loss.1} parent=1 // pred_fallthru
      _
    // Predicated region
    $region34: #{bilstm_crf_loss.1} parent=1 // pred_check
      _
    $region35: #{bilstm_crf_loss.1} parent=1 // pred_check_branch
      %33 = sbr.rel (0) target = $region37
    $region36: #{bilstm_crf_loss.1} parent=1 // pred_region
      _
    $region37: #{bilstm_crf_loss.1} parent=1 // pred_fallthru
      _
    // Predicated region
    $region38: #{bilstm_crf_loss.1} parent=1 // pred_check
      _
    $region39: #{bilstm_crf_loss.1} parent=1 // pred_check_branch
      %35 = sbr.rel (0) target = $region41
    $region40: #{bilstm_crf_loss.1} parent=1 // pred_region
      _
    $region41: #{bilstm_crf_loss.1} parent=1 // pred_fallthru
      _
    %v36 = vld [vmem:[%s0] sm:$0xff]
    %v37 = vld [vmem:[%s0 + $0x8] sm:$0xff]
    %v38 = vld [vmem:[%s1] sm:$0xff]
    %v39 = vld [vmem:[%s1 + $0x8] sm:$0xff]
    %v40 = vld [vmem:[%s1 + $0x10] sm:$0xff]
    %v41 = vld [vmem:[%s1 + $0x18] sm:$0xff]
    %v42 = vld [vmem:[%s3] sm:$0x3]
    %v44 = vlaneseq
    %v45 = vshrl.u32 %v44, 7
    %v46 = vsub.s32 0, %v45
    %v47 = vrot.slane %v42, %v46
    %v48 = vlaneseq
    %v49 = vshrl.u32 %v48, 7
    %v50 = vsub.s32 1, %v49
    %v51 = vrot.slane %v42, %v50
    %vm54 = vcmask 130048
    %v56 = vsel %vm54, %v36, 0
    %v59 = vsel %vm54, %v37, 0
    %61 = vmatprep.subr.mxu0 0.0
    %62 = vmatpush1.msra.mxu0 0.0
    %63 = vmatprep.subr.mxu0 0.0
    %64 = vmatpush1.msra.mxu0 0.0
    %65 = vmatprep.subr.mxu0 0.0
    %66 = vmatpush1.msra.mxu0 0.0
    %67 = vmatprep.subr.mxu0 0.0
    %68 = vmatpush1.msra.mxu0 0.0
    %69 = vmatprep.subr.mxu0 0.0
    %70 = vmatpush1.msra.mxu0 0.0
    %71 = vmatprep.subr.mxu0 0.0
    %72 = vmatpush1.msra.mxu0 0.0
    %73 = vmatprep.subr.mxu0 0.0
    %74 = vmatpush1.msra.mxu0 0.0
    %75 = vmatprep.subr.mxu0 0.0
    %76 = vmatpush1.msra.mxu0 0.0
    %77 = vmatprep.subr.mxu0 0.0
    %78 = vmatpush1.msra.mxu0 0.0
    %79 = vmatprep.subr.mxu0 0.0
    %80 = vmatpush1.msra.mxu0 0.0
    %81 = vmatprep.subr.mxu0 0.0
    %82 = vmatpush1.msra.mxu0 0.0
    %83 = vmatprep.subr.mxu0 0.0
    %84 = vmatpush1.msra.mxu0 0.0
    %85 = vmatprep.subr.mxu0 0.0
    %86 = vmatpush1.msra.mxu0 0.0
    %87 = vmatprep.subr.mxu0 0.0
    %88 = vmatpush1.msra.mxu0 0.0
    %89 = vmatprep.subr.mxu0 %v41
    %90 = vmatpush1.msra.mxu0 %v40
    %91 = vmatprep.subr.mxu0 %v39
    %92 = vmatpush1.msra.mxu0 %v38
    %93 = vmatprep.subr.mxu0 0.0
    %94 = vmatpush2.msra.mxu0 0.0
    %95 = vmatprep.subr.mxu0 0.0
    %96 = vmatpush2.msra.mxu0 0.0
    %97 = vmatprep.subr.mxu0 0.0
    %98 = vmatpush2.msra.mxu0 0.0
    %99 = vmatprep.subr.mxu0 0.0
    %100 = vmatpush2.msra.mxu0 0.0
    %101 = vmatprep.subr.mxu0 0.0
    %102 = vmatpush2.msra.mxu0 0.0
    %103 = vmatprep.subr.mxu0 0.0
    %104 = vmatpush2.msra.mxu0 0.0
    %105 = vmatprep.subr.mxu0 0.0
    %106 = vmatpush2.msra.mxu0 0.0
    %107 = vmatprep.subr.mxu0 0.0
    %108 = vmatpush2.msra.mxu0 0.0
    %109 = vmatprep.subr.mxu0 0.0
    %110 = vmatpush2.msra.mxu0 0.0
    %111 = vmatprep.subr.mxu0 0.0
    %112 = vmatpush2.msra.mxu0 0.0
    %113 = vmatprep.subr.mxu0 0.0
    %114 = vmatpush2.msra.mxu0 0.0
    %115 = vmatprep.subr.mxu0 0.0
    %116 = vmatpush2.msra.mxu0 0.0
    %117 = vmatprep.subr.mxu0 0.0
    %118 = vmatpush2.msra.mxu0 0.0
    %119 = vmatprep.subr.mxu0 0.0
    %120 = vmatpush2.msra.mxu0 0.0
    %121 = vmatprep.subr.mxu0 0.0
    %122 = vmatpush2.msra.mxu0 0.0
    %123 = vmatprep.subr.mxu0 0.0
    %124 = vmatpush2.msra.mxu0 0.0
    %125 = vmatprep.mubr.f32.mxu0 0.0
    %126 = vmatmul.mubr.f32.gmra.mxu0 %v56
    %v127 = vpop.f32.mrf.mxu0
    %v128 = vadd.f32 %v47, %v127
    %v129 = vpop.f32.mrf.mxu0
    %v130 = vadd.f32 %v51, %v129
    %131 = vmatprep.mubr.f32.mxu0 0.0
    %132 = vmatmul.mubr.f32.gmra.mxu0 %v59
    %v133 = vpop.f32.mrf.mxu0
    %v134 = vadd.f32 %v47, %v133
    %v135 = vpop.f32.mrf.mxu0
    %v136 = vadd.f32 %v51, %v135
    %137 = vdwg.mxu0
    %v138 = vld [vmem:[%s2] sm:$0xff]
    %v139 = vld [vmem:[%s2 + $0x8] sm:$0xff]
    %v140 = vld [vmem:[%s2 + $0x10] sm:$0xff]
    %v141 = vld [vmem:[%s2 + $0x18] sm:$0xff]
    %v142 = vld [vmem:[%s2 + $0x20] sm:$0xff]
    %v143 = vld [vmem:[%s2 + $0x28] sm:$0xff]
    %v144 = vld [vmem:[%s2 + $0x30] sm:$0xff]
    %v145 = vld [vmem:[%s2 + $0x38] sm:$0xff]
    %v146 = vld [vmem:[%s7] sm:$0x1f]
    %v147 = vld [vmem:[%s6] sm:$0x7]
    %v148 = vld [vmem:[%s9] sm:$0xff]
    %v149 = vld [vmem:[%s9 + $0x8] sm:$0xff]
    %v150 = vld [vmem:[%s4] sm:$0xf]
    %v151 = vld [vmem:[%s4 + $0x4] sm:$0xf]
    %vm152 = vcmask 261120
    %v154 = vsel %vm152, %v150, 0
    %156 = vmatprep.subr.mxu0 0.0
    %157 = vmatpush1.msra.mxu0 0.0
    %158 = vmatprep.subr.mxu0 0.0
    %159 = vmatpush1.msra.mxu0 0.0
    %160 = vmatprep.subr.mxu0 0.0
    %161 = vmatpush1.msra.mxu0 0.0
    %162 = vmatprep.subr.mxu0 0.0
    %163 = vmatpush1.msra.mxu0 0.0
    %164 = vmatprep.subr.mxu0 0.0
    %165 = vmatpush1.msra.mxu0 0.0
    %166 = vmatprep.subr.mxu0 0.0
    %167 = vmatpush1.msra.mxu0 0.0
    %168 = vmatprep.subr.mxu0 0.0
    %169 = vmatpush1.msra.mxu0 0.0
    %170 = vmatprep.subr.mxu0 0.0
    %171 = vmatpush1.msra.mxu0 0.0
    %172 = vmatprep.subr.mxu0 0.0
    %173 = vmatpush1.msra.mxu0 0.0
    %174 = vmatprep.subr.mxu0 0.0
    %175 = vmatpush1.msra.mxu0 0.0
    %176 = vmatprep.subr.mxu0 0.0
    %177 = vmatpush1.msra.mxu0 0.0
    %178 = vmatprep.subr.mxu0 0.0
    %179 = vmatpush1.msra.mxu0 0.0
    %180 = vmatprep.subr.mxu0 %v145
    %181 = vmatpush1.msra.mxu0 %v144
    %182 = vmatprep.subr.mxu0 %v143
    %183 = vmatpush1.msra.mxu0 %v142
    %184 = vmatprep.subr.mxu0 %v141
    %185 = vmatpush1.msra.mxu0 %v140
    %186 = vmatprep.subr.mxu0 %v139
    %187 = vmatpush1.msra.mxu0 %v138
    %188 = vmatprep.subr.mxu0 0.0
    %189 = vmatpush2.msra.mxu0 0.0
    %190 = vmatprep.subr.mxu0 0.0
    %191 = vmatpush2.msra.mxu0 0.0
    %192 = vmatprep.subr.mxu0 0.0
    %193 = vmatpush2.msra.mxu0 0.0
    %194 = vmatprep.subr.mxu0 0.0
    %195 = vmatpush2.msra.mxu0 0.0
    %196 = vmatprep.subr.mxu0 0.0
    %197 = vmatpush2.msra.mxu0 0.0
    %198 = vmatprep.subr.mxu0 0.0
    %199 = vmatpush2.msra.mxu0 0.0
    %200 = vmatprep.subr.mxu0 0.0
    %201 = vmatpush2.msra.mxu0 0.0
    %202 = vmatprep.subr.mxu0 0.0
    %203 = vmatpush2.msra.mxu0 0.0
    %204 = vmatprep.subr.mxu0 0.0
    %205 = vmatpush2.msra.mxu0 0.0
    %206 = vmatprep.subr.mxu0 0.0
    %207 = vmatpush2.msra.mxu0 0.0
    %208 = vmatprep.subr.mxu0 0.0
    %209 = vmatpush2.msra.mxu0 0.0
    %210 = vmatprep.subr.mxu0 0.0
    %211 = vmatpush2.msra.mxu0 0.0
    %212 = vmatprep.subr.mxu0 0.0
    %213 = vmatpush2.msra.mxu0 0.0
    %214 = vmatprep.subr.mxu0 0.0
    %215 = vmatpush2.msra.mxu0 0.0
    %216 = vmatprep.subr.mxu0 0.0
    %217 = vmatpush2.msra.mxu0 0.0
    %218 = vmatprep.subr.mxu0 0.0
    %219 = vmatpush2.msra.mxu0 0.0
    %220 = vmatprep.mubr.f32.mxu0 0.0
    %221 = vmatmul.mubr.f32.gmra.mxu0 %v154
    %v222 = vpop.f32.mrf.mxu0
    %v223 = vadd.f32 0.0, %v222
    %v224 = vpop.f32.mrf.mxu0
    %v225 = vadd.f32 0.0, %v224
    %226 = vdwg.mxu0
    %v227 = vadd.f32 %v128, %v223
    %v229 = vrot.slane %v225, 4
    %v231 = vadd.f32 %v136, %v229
    %v233 = vrot.slane %v231, 4
    %vm235 = vcmask 1041408
    %v236 = vsel %vm235, %v227, %v233
    %v237 = vxor.u32 %v236, 2147483648
    %v238 = vmul.f32 %v237, 1.442695
    %v239 = vpow.pop %v238
    %v240 = vadd.f32 %v239, 1.0
    %v241 = vrcp.pop %v240
    %v242 = vmul.f32 1.0, %v241
    %v243 = vtanh.pop %v236
    %245 = vrot.lane.b32.xlu0 %v151, 32
    %v246 = vpop.permute.xlu0 %245
    %v248 = vmul.f32 %v242, %v246
    %250 = vrot.lane.b32.xlu0 %v243, 32
    %v251 = vpop.permute.xlu0 %250
    %v253 = vmul.f32 %v242, %v251
    %255 = vrot.lane.b32.xlu0 %v253, 32
    %v256 = vpop.permute.xlu0 %255
    %v258 = vadd.f32 %v248, %v256
    %v259 = vtanh.pop %v258
    %261 = vrot.lane.b32.xlu0 %v259, 32
    %v262 = vpop.permute.xlu0 %261
    %v264 = vmul.f32 %v242, %v262
    %266 = vrot.lane.b32.xlu0 %v264, 64
    %v267 = vpop.permute.xlu0 %266
    %v268 = vsel %vm152, %v267, 0
    %270 = vmatprep.subr.mxu0 0.0
    %271 = vmatpush1.msra.mxu0 0.0
    %272 = vmatprep.subr.mxu0 0.0
    %273 = vmatpush1.msra.mxu0 0.0
    %274 = vmatprep.subr.mxu0 0.0
    %275 = vmatpush1.msra.mxu0 0.0
    %276 = vmatprep.subr.mxu0 0.0
    %277 = vmatpush1.msra.mxu0 0.0
    %278 = vmatprep.subr.mxu0 0.0
    %279 = vmatpush1.msra.mxu0 0.0
    %280 = vmatprep.subr.mxu0 0.0
    %281 = vmatpush1.msra.mxu0 0.0
    %282 = vmatprep.subr.mxu0 0.0
    %283 = vmatpush1.msra.mxu0 0.0
    %284 = vmatprep.subr.mxu0 0.0
    %285 = vmatpush1.msra.mxu0 0.0
    %286 = vmatprep.subr.mxu0 0.0
    %287 = vmatpush1.msra.mxu0 0.0
    %288 = vmatprep.subr.mxu0 0.0
    %289 = vmatpush1.msra.mxu0 0.0
    %290 = vmatprep.subr.mxu0 0.0
    %291 = vmatpush1.msra.mxu0 0.0
    %292 = vmatprep.subr.mxu0 0.0
    %293 = vmatpush1.msra.mxu0 0.0
    %294 = vmatprep.subr.mxu0 %v145
    %295 = vmatpush1.msra.mxu0 %v144
    %296 = vmatprep.subr.mxu0 %v143
    %297 = vmatpush1.msra.mxu0 %v142
    %298 = vmatprep.subr.mxu0 %v141
    %299 = vmatpush1.msra.mxu0 %v140
    %300 = vmatprep.subr.mxu0 %v139
    %301 = vmatpush1.msra.mxu0 %v138
    %302 = vmatprep.subr.mxu0 0.0
    %303 = vmatpush2.msra.mxu0 0.0
    %304 = vmatprep.subr.mxu0 0.0
    %305 = vmatpush2.msra.mxu0 0.0
    %306 = vmatprep.subr.mxu0 0.0
    %307 = vmatpush2.msra.mxu0 0.0
    %308 = vmatprep.subr.mxu0 0.0
    %309 = vmatpush2.msra.mxu0 0.0
    %310 = vmatprep.subr.mxu0 0.0
    %311 = vmatpush2.msra.mxu0 0.0
    %312 = vmatprep.subr.mxu0 0.0
    %313 = vmatpush2.msra.mxu0 0.0
    %314 = vmatprep.subr.mxu0 0.0
    %315 = vmatpush2.msra.mxu0 0.0
    %316 = vmatprep.subr.mxu0 0.0
    %317 = vmatpush2.msra.mxu0 0.0
    %318 = vmatprep.subr.mxu0 0.0
    %319 = vmatpush2.msra.mxu0 0.0
    %320 = vmatprep.subr.mxu0 0.0
    %321 = vmatpush2.msra.mxu0 0.0
    %322 = vmatprep.subr.mxu0 0.0
    %323 = vmatpush2.msra.mxu0 0.0
    %324 = vmatprep.subr.mxu0 0.0
    %325 = vmatpush2.msra.mxu0 0.0
    %326 = vmatprep.subr.mxu0 0.0
    %327 = vmatpush2.msra.mxu0 0.0
    %328 = vmatprep.subr.mxu0 0.0
    %329 = vmatpush2.msra.mxu0 0.0
    %330 = vmatprep.subr.mxu0 0.0
    %331 = vmatpush2.msra.mxu0 0.0
    %332 = vmatprep.subr.mxu0 0.0
    %333 = vmatpush2.msra.mxu0 0.0
    %334 = vmatprep.mubr.f32.mxu0 0.0
    %335 = vmatmul.mubr.f32.gmra.mxu0 %v268
    %v336 = vpop.f32.mrf.mxu0
    %v337 = vadd.f32 0.0, %v336
    %v338 = vpop.f32.mrf.mxu0
    %v339 = vadd.f32 0.0, %v338
    %340 = vdwg.mxu0
    %v342 = vrot.slane %v337, 6
    %v344 = vadd.f32 %v128, %v342
    %v346 = vrot.slane %v339, 6
    %v348 = vadd.f32 %v136, %v346
    %v350 = vrot.slane %v344, 2
    %v353 = vrot.slane %v348, 2
    %v355 = vsel %vm235, %v350, %v353
    %v356 = vxor.u32 %v355, 2147483648
    %v357 = vmul.f32 %v356, 1.442695
    %v358 = vpow.pop %v357
    %v359 = vadd.f32 %v358, 1.0
    %v360 = vrcp.pop %v359
    %v361 = vmul.f32 1.0, %v360
    %v362 = vtanh.pop %v355
    %v363 = vmul.f32 %v361, %v258
    %365 = vrot.lane.b32.xlu0 %v362, 32
    %v366 = vpop.permute.xlu0 %365
    %v368 = vmul.f32 %v361, %v366
    %370 = vrot.lane.b32.xlu0 %v368, 32
    %v371 = vpop.permute.xlu0 %370
    %v373 = vadd.f32 %v363, %v371
    %v374 = vtanh.pop %v373
    %376 = vrot.lane.b32.xlu0 %v374, 32
    %v377 = vpop.permute.xlu0 %376
    %v379 = vmul.f32 %v361, %v377
    %381 = vrot.lane.b32.xlu0 %v379, 64
    %v382 = vpop.permute.xlu0 %381
    %v383 = vsel %vm152, %v382, 0
    %385 = vmatprep.subr.mxu0 0.0
    %386 = vmatpush1.msra.mxu0 0.0
    %387 = vmatprep.subr.mxu0 0.0
    %388 = vmatpush1.msra.mxu0 0.0
    %389 = vmatprep.subr.mxu0 0.0
    %390 = vmatpush1.msra.mxu0 0.0
    %391 = vmatprep.subr.mxu0 0.0
    %392 = vmatpush1.msra.mxu0 0.0
    %393 = vmatprep.subr.mxu0 0.0
    %394 = vmatpush1.msra.mxu0 0.0
    %395 = vmatprep.subr.mxu0 0.0
    %396 = vmatpush1.msra.mxu0 0.0
    %397 = vmatprep.subr.mxu0 0.0
    %398 = vmatpush1.msra.mxu0 0.0
    %399 = vmatprep.subr.mxu0 0.0
    %400 = vmatpush1.msra.mxu0 0.0
    %401 = vmatprep.subr.mxu0 0.0
    %402 = vmatpush1.msra.mxu0 0.0
    %403 = vmatprep.subr.mxu0 0.0
    %404 = vmatpush1.msra.mxu0 0.0
    %405 = vmatprep.subr.mxu0 0.0
    %406 = vmatpush1.msra.mxu0 0.0
    %407 = vmatprep.subr.mxu0 0.0
    %408 = vmatpush1.msra.mxu0 0.0
    %409 = vmatprep.subr.mxu0 %v145
    %410 = vmatpush1.msra.mxu0 %v144
    %411 = vmatprep.subr.mxu0 %v143
    %412 = vmatpush1.msra.mxu0 %v142
    %413 = vmatprep.subr.mxu0 %v141
    %414 = vmatpush1.msra.mxu0 %v140
    %415 = vmatprep.subr.mxu0 %v139
    %416 = vmatpush1.msra.mxu0 %v138
    %417 = vmatprep.subr.mxu0 0.0
    %418 = vmatpush2.msra.mxu0 0.0
    %419 = vmatprep.subr.mxu0 0.0
    %420 = vmatpush2.msra.mxu0 0.0
    %421 = vmatprep.subr.mxu0 0.0
    %422 = vmatpush2.msra.mxu0 0.0
    %423 = vmatprep.subr.mxu0 0.0
    %424 = vmatpush2.msra.mxu0 0.0
    %425 = vmatprep.subr.mxu0 0.0
    %426 = vmatpush2.msra.mxu0 0.0
    %427 = vmatprep.subr.mxu0 0.0
    %428 = vmatpush2.msra.mxu0 0.0
    %429 = vmatprep.subr.mxu0 0.0
    %430 = vmatpush2.msra.mxu0 0.0
    %431 = vmatprep.subr.mxu0 0.0
    %432 = vmatpush2.msra.mxu0 0.0
    %433 = vmatprep.subr.mxu0 0.0
    %434 = vmatpush2.msra.mxu0 0.0
    %435 = vmatprep.subr.mxu0 0.0
    %436 = vmatpush2.msra.mxu0 0.0
    %437 = vmatprep.subr.mxu0 0.0
    %438 = vmatpush2.msra.mxu0 0.0
    %439 = vmatprep.subr.mxu0 0.0
    %440 = vmatpush2.msra.mxu0 0.0
    %441 = vmatprep.subr.mxu0 0.0
    %442 = vmatpush2.msra.mxu0 0.0
    %443 = vmatprep.subr.mxu0 0.0
    %444 = vmatpush2.msra.mxu0 0.0
    %445 = vmatprep.subr.mxu0 0.0
    %446 = vmatpush2.msra.mxu0 0.0
    %447 = vmatprep.subr.mxu0 0.0
    %448 = vmatpush2.msra.mxu0 0.0
    %449 = vmatprep.mubr.f32.mxu0 0.0
    %450 = vmatmul.mubr.f32.gmra.mxu0 %v383
    %v451 = vpop.f32.mrf.mxu0
    %v452 = vadd.f32 0.0, %v451
    %v453 = vpop.f32.mrf.mxu0
    %v454 = vadd.f32 0.0, %v453
    %455 = vdwg.mxu0
    %v457 = vrot.slane %v452, 4
    %v459 = vadd.f32 %v128, %v457
    %v460 = vadd.f32 %v136, %v454
    %v462 = vrot.slane %v459, 4
    %v464 = vsel %vm235, %v462, %v460
    %v465 = vxor.u32 %v464, 2147483648
    %v466 = vmul.f32 %v465, 1.442695
    %v467 = vpow.pop %v466
    %v468 = vadd.f32 %v467, 1.0
    %v469 = vrcp.pop %v468
    %v470 = vmul.f32 1.0, %v469
    %v471 = vtanh.pop %v464
    %v472 = vmul.f32 %v470, %v373
    %474 = vrot.lane.b32.xlu0 %v471, 32
    %v475 = vpop.permute.xlu0 %474
    %v477 = vmul.f32 %v470, %v475
    %479 = vrot.lane.b32.xlu0 %v477, 32
    %v480 = vpop.permute.xlu0 %479
    %v482 = vadd.f32 %v472, %v480
    %v483 = vtanh.pop %v482
    %485 = vrot.lane.b32.xlu0 %v483, 32
    %v486 = vpop.permute.xlu0 %485
    %v488 = vmul.f32 %v470, %v486
    %490 = vrot.lane.b32.xlu0 %v488, 64
    %v491 = vpop.permute.xlu0 %490
    %v492 = vsel %vm152, %v491, 0
    %494 = vmatprep.subr.mxu0 0.0
    %495 = vmatpush1.msra.mxu0 0.0
    %496 = vmatprep.subr.mxu0 0.0
    %497 = vmatpush1.msra.mxu0 0.0
    %498 = vmatprep.subr.mxu0 0.0
    %499 = vmatpush1.msra.mxu0 0.0
    %500 = vmatprep.subr.mxu0 0.0
    %501 = vmatpush1.msra.mxu0 0.0
    %502 = vmatprep.subr.mxu0 0.0
    %503 = vmatpush1.msra.mxu0 0.0
    %504 = vmatprep.subr.mxu0 0.0
    %505 = vmatpush1.msra.mxu0 0.0
    %506 = vmatprep.subr.mxu0 0.0
    %507 = vmatpush1.msra.mxu0 0.0
    %508 = vmatprep.subr.mxu0 0.0
    %509 = vmatpush1.msra.mxu0 0.0
    %510 = vmatprep.subr.mxu0 0.0
    %511 = vmatpush1.msra.mxu0 0.0
    %512 = vmatprep.subr.mxu0 0.0
    %513 = vmatpush1.msra.mxu0 0.0
    %514 = vmatprep.subr.mxu0 0.0
    %515 = vmatpush1.msra.mxu0 0.0
    %516 = vmatprep.subr.mxu0 0.0
    %517 = vmatpush1.msra.mxu0 0.0
    %518 = vmatprep.subr.mxu0 %v145
    %519 = vmatpush1.msra.mxu0 %v144
    %520 = vmatprep.subr.mxu0 %v143
    %521 = vmatpush1.msra.mxu0 %v142
    %522 = vmatprep.subr.mxu0 %v141
    %523 = vmatpush1.msra.mxu0 %v140
    %524 = vmatprep.subr.mxu0 %v139
    %525 = vmatpush1.msra.mxu0 %v138
    %526 = vmatprep.subr.mxu0 0.0
    %527 = vmatpush2.msra.mxu0 0.0
    %528 = vmatprep.subr.mxu0 0.0
    %529 = vmatpush2.msra.mxu0 0.0
    %530 = vmatprep.subr.mxu0 0.0
    %531 = vmatpush2.msra.mxu0 0.0
    %532 = vmatprep.subr.mxu0 0.0
    %533 = vmatpush2.msra.mxu0 0.0
    %534 = vmatprep.subr.mxu0 0.0
    %535 = vmatpush2.msra.mxu0 0.0
    %536 = vmatprep.subr.mxu0 0.0
    %537 = vmatpush2.msra.mxu0 0.0
    %538 = vmatprep.subr.mxu0 0.0
    %539 = vmatpush2.msra.mxu0 0.0
    %540 = vmatprep.subr.mxu0 0.0
    %541 = vmatpush2.msra.mxu0 0.0
    %542 = vmatprep.subr.mxu0 0.0
    %543 = vmatpush2.msra.mxu0 0.0
    %544 = vmatprep.subr.mxu0 0.0
    %545 = vmatpush2.msra.mxu0 0.0
    %546 = vmatprep.subr.mxu0 0.0
    %547 = vmatpush2.msra.mxu0 0.0
    %548 = vmatprep.subr.mxu0 0.0
    %549 = vmatpush2.msra.mxu0 0.0
    %550 = vmatprep.subr.mxu0 0.0
    %551 = vmatpush2.msra.mxu0 0.0
    %552 = vmatprep.subr.mxu0 0.0
    %553 = vmatpush2.msra.mxu0 0.0
    %554 = vmatprep.subr.mxu0 0.0
    %555 = vmatpush2.msra.mxu0 0.0
    %556 = vmatprep.subr.mxu0 0.0
    %557 = vmatpush2.msra.mxu0 0.0
    %558 = vmatprep.mubr.f32.mxu0 0.0
    %559 = vmatmul.mubr.f32.gmra.mxu0 %v492
    %v560 = vpop.f32.mrf.mxu0
    %v561 = vadd.f32 0.0, %v560
    %v562 = vpop.f32.mrf.mxu0
    %v563 = vadd.f32 0.0, %v562
    %564 = vdwg.mxu0
    %v566 = vrot.slane %v561, 2
    %v568 = vadd.f32 %v128, %v566
    %v570 = vrot.slane %v563, 2
    %v572 = vadd.f32 %v136, %v570
    %v574 = vrot.slane %v568, 6
    %v577 = vrot.slane %v572, 6
    %v579 = vsel %vm235, %v574, %v577
    %v580 = vxor.u32 %v579, 2147483648
    %v581 = vmul.f32 %v580, 1.442695
    %v582 = vpow.pop %v581
    %v583 = vadd.f32 %v582, 1.0
    %v584 = vrcp.pop %v583
    %v585 = vmul.f32 1.0, %v584
    %v586 = vtanh.pop %v579
    %v587 = vmul.f32 %v585, %v482
    %589 = vrot.lane.b32.xlu0 %v586, 32
    %v590 = vpop.permute.xlu0 %589
    %v592 = vmul.f32 %v585, %v590
    %594 = vrot.lane.b32.xlu0 %v592, 32
    %v595 = vpop.permute.xlu0 %594
    %v597 = vadd.f32 %v587, %v595
    %v598 = vtanh.pop %v597
    %600 = vrot.lane.b32.xlu0 %v598, 32
    %v601 = vpop.permute.xlu0 %600
    %v603 = vmul.f32 %v585, %v601
    %605 = vrot.lane.b32.xlu0 %v603, 64
    %v606 = vpop.permute.xlu0 %605
    %v607 = vsel %vm152, %v606, 0
    %609 = vmatprep.subr.mxu0 0.0
    %610 = vmatpush1.msra.mxu0 0.0
    %611 = vmatprep.subr.mxu0 0.0
    %612 = vmatpush1.msra.mxu0 0.0
    %613 = vmatprep.subr.mxu0 0.0
    %614 = vmatpush1.msra.mxu0 0.0
    %615 = vmatprep.subr.mxu0 0.0
    %616 = vmatpush1.msra.mxu0 0.0
    %617 = vmatprep.subr.mxu0 0.0
    %618 = vmatpush1.msra.mxu0 0.0
    %619 = vmatprep.subr.mxu0 0.0
    %620 = vmatpush1.msra.mxu0 0.0
    %621 = vmatprep.subr.mxu0 0.0
    %622 = vmatpush1.msra.mxu0 0.0
    %623 = vmatprep.subr.mxu0 0.0
    %624 = vmatpush1.msra.mxu0 0.0
    %625 = vmatprep.subr.mxu0 0.0
    %626 = vmatpush1.msra.mxu0 0.0
    %627 = vmatprep.subr.mxu0 0.0
    %628 = vmatpush1.msra.mxu0 0.0
    %629 = vmatprep.subr.mxu0 0.0
    %630 = vmatpush1.msra.mxu0 0.0
    %631 = vmatprep.subr.mxu0 0.0
    %632 = vmatpush1.msra.mxu0 0.0
    %633 = vmatprep.subr.mxu0 %v145
    %634 = vmatpush1.msra.mxu0 %v144
    %635 = vmatprep.subr.mxu0 %v143
    %636 = vmatpush1.msra.mxu0 %v142
    %637 = vmatprep.subr.mxu0 %v141
    %638 = vmatpush1.msra.mxu0 %v140
    %639 = vmatprep.subr.mxu0 %v139
    %640 = vmatpush1.msra.mxu0 %v138
    %641 = vmatprep.subr.mxu0 0.0
    %642 = vmatpush2.msra.mxu0 0.0
    %643 = vmatprep.subr.mxu0 0.0
    %644 = vmatpush2.msra.mxu0 0.0
    %645 = vmatprep.subr.mxu0 0.0
    %646 = vmatpush2.msra.mxu0 0.0
    %647 = vmatprep.subr.mxu0 0.0
    %648 = vmatpush2.msra.mxu0 0.0
    %649 = vmatprep.subr.mxu0 0.0
    %650 = vmatpush2.msra.mxu0 0.0
    %651 = vmatprep.subr.mxu0 0.0
    %652 = vmatpush2.msra.mxu0 0.0
    %653 = vmatprep.subr.mxu0 0.0
    %654 = vmatpush2.msra.mxu0 0.0
    %655 = vmatprep.subr.mxu0 0.0
    %656 = vmatpush2.msra.mxu0 0.0
    %657 = vmatprep.subr.mxu0 0.0
    %658 = vmatpush2.msra.mxu0 0.0
    %659 = vmatprep.subr.mxu0 0.0
    %660 = vmatpush2.msra.mxu0 0.0
    %661 = vmatprep.subr.mxu0 0.0
    %662 = vmatpush2.msra.mxu0 0.0
    %663 = vmatprep.subr.mxu0 0.0
    %664 = vmatpush2.msra.mxu0 0.0
    %665 = vmatprep.subr.mxu0 0.0
    %666 = vmatpush2.msra.mxu0 0.0
    %667 = vmatprep.subr.mxu0 0.0
    %668 = vmatpush2.msra.mxu0 0.0
    %669 = vmatprep.subr.mxu0 0.0
    %670 = vmatpush2.msra.mxu0 0.0
    %671 = vmatprep.subr.mxu0 0.0
    %672 = vmatpush2.msra.mxu0 0.0
    %673 = vmatprep.mubr.f32.mxu0 0.0
    %674 = vmatmul.mubr.f32.gmra.mxu0 %v607
    %v675 = vpop.f32.mrf.mxu0
    %v676 = vadd.f32 0.0, %v675
    %v677 = vpop.f32.mrf.mxu0
    %v678 = vadd.f32 0.0, %v677
    %679 = vdwg.mxu0
    %v680 = vadd.f32 %v134, %v676
    %v682 = vrot.slane %v678, 4
    %v684 = vadd.f32 %v130, %v682
    %v686 = vrot.slane %v684, 4
    %v688 = vsel %vm235, %v680, %v686
    %v689 = vxor.u32 %v688, 2147483648
    %v690 = vmul.f32 %v689, 1.442695
    %v691 = vpow.pop %v690
    %v692 = vadd.f32 %v691, 1.0
    %v693 = vrcp.pop %v692
    %v694 = vmul.f32 1.0, %v693
    %v695 = vtanh.pop %v688
    %v696 = vmul.f32 %v694, %v597
    %698 = vrot.lane.b32.xlu0 %v695, 32
    %v699 = vpop.permute.xlu0 %698
    %v701 = vmul.f32 %v694, %v699
    %703 = vrot.lane.b32.xlu0 %v701, 32
    %v704 = vpop.permute.xlu0 %703
    %v706 = vadd.f32 %v696, %v704
    %v707 = vtanh.pop %v706
    %709 = vrot.lane.b32.xlu0 %v707, 32
    %v710 = vpop.permute.xlu0 %709
    %v712 = vmul.f32 %v694, %v710
    %714 = vrot.lane.b32.xlu0 %v712, 64
    %v715 = vpop.permute.xlu0 %714
    %v716 = vsel %vm152, %v715, 0
    %718 = vmatprep.subr.mxu0 0.0
    %719 = vmatpush1.msra.mxu0 0.0
    %720 = vmatprep.subr.mxu0 0.0
    %721 = vmatpush1.msra.mxu0 0.0
    %722 = vmatprep.subr.mxu0 0.0
    %723 = vmatpush1.msra.mxu0 0.0
    %724 = vmatprep.subr.mxu0 0.0
    %725 = vmatpush1.msra.mxu0 0.0
    %726 = vmatprep.subr.mxu0 0.0
    %727 = vmatpush1.msra.mxu0 0.0
    %728 = vmatprep.subr.mxu0 0.0
    %729 = vmatpush1.msra.mxu0 0.0
    %730 = vmatprep.subr.mxu0 0.0
    %731 = vmatpush1.msra.mxu0 0.0
    %732 = vmatprep.subr.mxu0 0.0
    %733 = vmatpush1.msra.mxu0 0.0
    %734 = vmatprep.subr.mxu0 0.0
    %735 = vmatpush1.msra.mxu0 0.0
    %736 = vmatprep.subr.mxu0 0.0
    %737 = vmatpush1.msra.mxu0 0.0
    %738 = vmatprep.subr.mxu0 0.0
    %739 = vmatpush1.msra.mxu0 0.0
    %740 = vmatprep.subr.mxu0 0.0
    %741 = vmatpush1.msra.mxu0 0.0
    %742 = vmatprep.subr.mxu0 %v145
    %743 = vmatpush1.msra.mxu0 %v144
    %744 = vmatprep.subr.mxu0 %v143
    %745 = vmatpush1.msra.mxu0 %v142
    %746 = vmatprep.subr.mxu0 %v141
    %747 = vmatpush1.msra.mxu0 %v140
    %748 = vmatprep.subr.mxu0 %v139
    %749 = vmatpush1.msra.mxu0 %v138
    %750 = vmatprep.subr.mxu0 0.0
    %751 = vmatpush2.msra.mxu0 0.0
    %752 = vmatprep.subr.mxu0 0.0
    %753 = vmatpush2.msra.mxu0 0.0
    %754 = vmatprep.subr.mxu0 0.0
    %755 = vmatpush2.msra.mxu0 0.0
    %756 = vmatprep.subr.mxu0 0.0
    %757 = vmatpush2.msra.mxu0 0.0
    %758 = vmatprep.subr.mxu0 0.0
    %759 = vmatpush2.msra.mxu0 0.0
    %760 = vmatprep.subr.mxu0 0.0
    %761 = vmatpush2.msra.mxu0 0.0
    %762 = vmatprep.subr.mxu0 0.0
    %763 = vmatpush2.msra.mxu0 0.0
    %764 = vmatprep.subr.mxu0 0.0
    %765 = vmatpush2.msra.mxu0 0.0
    %766 = vmatprep.subr.mxu0 0.0
    %767 = vmatpush2.msra.mxu0 0.0
    %768 = vmatprep.subr.mxu0 0.0
    %769 = vmatpush2.msra.mxu0 0.0
    %770 = vmatprep.subr.mxu0 0.0
    %771 = vmatpush2.msra.mxu0 0.0
    %772 = vmatprep.subr.mxu0 0.0
    %773 = vmatpush2.msra.mxu0 0.0
    %774 = vmatprep.subr.mxu0 0.0
    %775 = vmatpush2.msra.mxu0 0.0
    %776 = vmatprep.subr.mxu0 0.0
    %777 = vmatpush2.msra.mxu0 0.0
    %778 = vmatprep.subr.mxu0 0.0
    %779 = vmatpush2.msra.mxu0 0.0
    %780 = vmatprep.subr.mxu0 0.0
    %781 = vmatpush2.msra.mxu0 0.0
    %782 = vmatprep.mubr.f32.mxu0 0.0
    %783 = vmatmul.mubr.f32.gmra.mxu0 %v716
    %v784 = vpop.f32.mrf.mxu0
    %v785 = vadd.f32 0.0, %v784
    %v786 = vpop.f32.mrf.mxu0
    %v787 = vadd.f32 0.0, %v786
    %788 = vdwg.mxu0
    %v790 = vrot.slane %v785, 6
    %v792 = vadd.f32 %v134, %v790
    %v794 = vrot.slane %v787, 6
    %v796 = vadd.f32 %v130, %v794
    %v798 = vrot.slane %v792, 2
    %v801 = vrot.slane %v796, 2
    %v803 = vsel %vm235, %v798, %v801
    %v804 = vxor.u32 %v803, 2147483648
    %v805 = vmul.f32 %v804, 1.442695
    %v806 = vpow.pop %v805
    %v807 = vadd.f32 %v806, 1.0
    %v808 = vrcp.pop %v807
    %v809 = vmul.f32 1.0, %v808
    %v810 = vtanh.pop %v803
    %v811 = vmul.f32 %v809, %v706
    %813 = vrot.lane.b32.xlu0 %v810, 32
    %v814 = vpop.permute.xlu0 %813
    %v816 = vmul.f32 %v809, %v814
    %818 = vrot.lane.b32.xlu0 %v816, 32
    %v819 = vpop.permute.xlu0 %818
    %v821 = vadd.f32 %v811, %v819
    %v822 = vtanh.pop %v821
    %824 = vrot.lane.b32.xlu0 %v822, 32
    %v825 = vpop.permute.xlu0 %824
    %v827 = vmul.f32 %v809, %v825
    %829 = vrot.lane.b32.xlu0 %v827, 64
    %v830 = vpop.permute.xlu0 %829
    %v831 = vsel %vm152, %v830, 0
    %833 = vmatprep.subr.mxu0 0.0
    %834 = vmatpush1.msra.mxu0 0.0
    %835 = vmatprep.subr.mxu0 0.0
    %836 = vmatpush1.msra.mxu0 0.0
    %837 = vmatprep.subr.mxu0 0.0
    %838 = vmatpush1.msra.mxu0 0.0
    %839 = vmatprep.subr.mxu0 0.0
    %840 = vmatpush1.msra.mxu0 0.0
    %841 = vmatprep.subr.mxu0 0.0
    %842 = vmatpush1.msra.mxu0 0.0
    %843 = vmatprep.subr.mxu0 0.0
    %844 = vmatpush1.msra.mxu0 0.0
    %845 = vmatprep.subr.mxu0 0.0
    %846 = vmatpush1.msra.mxu0 0.0
    %847 = vmatprep.subr.mxu0 0.0
    %848 = vmatpush1.msra.mxu0 0.0
    %849 = vmatprep.subr.mxu0 0.0
    %850 = vmatpush1.msra.mxu0 0.0
    %851 = vmatprep.subr.mxu0 0.0
    %852 = vmatpush1.msra.mxu0 0.0
    %853 = vmatprep.subr.mxu0 0.0
    %854 = vmatpush1.msra.mxu0 0.0
    %855 = vmatprep.subr.mxu0 0.0
    %856 = vmatpush1.msra.mxu0 0.0
    %857 = vmatprep.subr.mxu0 %v145
    %858 = vmatpush1.msra.mxu0 %v144
    %859 = vmatprep.subr.mxu0 %v143
    %860 = vmatpush1.msra.mxu0 %v142
    %861 = vmatprep.subr.mxu0 %v141
    %862 = vmatpush1.msra.mxu0 %v140
    %863 = vmatprep.subr.mxu0 %v139
    %864 = vmatpush1.msra.mxu0 %v138
    %865 = vmatprep.subr.mxu0 0.0
    %866 = vmatpush2.msra.mxu0 0.0
    %867 = vmatprep.subr.mxu0 0.0
    %868 = vmatpush2.msra.mxu0 0.0
    %869 = vmatprep.subr.mxu0 0.0
    %870 = vmatpush2.msra.mxu0 0.0
    %871 = vmatprep.subr.mxu0 0.0
    %872 = vmatpush2.msra.mxu0 0.0
    %873 = vmatprep.subr.mxu0 0.0
    %874 = vmatpush2.msra.mxu0 0.0
    %875 = vmatprep.subr.mxu0 0.0
    %876 = vmatpush2.msra.mxu0 0.0
    %877 = vmatprep.subr.mxu0 0.0
    %878 = vmatpush2.msra.mxu0 0.0
    %879 = vmatprep.subr.mxu0 0.0
    %880 = vmatpush2.msra.mxu0 0.0
    %881 = vmatprep.subr.mxu0 0.0
    %882 = vmatpush2.msra.mxu0 0.0
    %883 = vmatprep.subr.mxu0 0.0
    %884 = vmatpush2.msra.mxu0 0.0
    %885 = vmatprep.subr.mxu0 0.0
    %886 = vmatpush2.msra.mxu0 0.0
    %887 = vmatprep.subr.mxu0 0.0
    %888 = vmatpush2.msra.mxu0 0.0
    %889 = vmatprep.subr.mxu0 0.0
    %890 = vmatpush2.msra.mxu0 0.0
    %891 = vmatprep.subr.mxu0 0.0
    %892 = vmatpush2.msra.mxu0 0.0
    %893 = vmatprep.subr.mxu0 0.0
    %894 = vmatpush2.msra.mxu0 0.0
    %895 = vmatprep.subr.mxu0 0.0
    %896 = vmatpush2.msra.mxu0 0.0
    %897 = vmatprep.mubr.f32.mxu0 0.0
    %898 = vmatmul.mubr.f32.gmra.mxu0 %v831
    %v899 = vpop.f32.mrf.mxu0
    %v900 = vadd.f32 0.0, %v899
    %v901 = vpop.f32.mrf.mxu0
    %v902 = vadd.f32 0.0, %v901
    %903 = vdwg.mxu0
    %v905 = vrot.slane %v900, 4
    %v907 = vadd.f32 %v134, %v905
    %v908 = vadd.f32 %v130, %v902
    %v910 = vrot.slane %v907, 4
    %v912 = vsel %vm235, %v910, %v908
    %v913 = vxor.u32 %v912, 2147483648
    %v914 = vmul.f32 %v913, 1.442695
    %v915 = vpow.pop %v914
    %v916 = vadd.f32 %v915, 1.0
    %v917 = vrcp.pop %v916
    %v918 = vmul.f32 1.0, %v917
    %v919 = vtanh.pop %v912
    %v920 = vmul.f32 %v918, %v821
    %922 = vrot.lane.b32.xlu0 %v919, 32
    %v923 = vpop.permute.xlu0 %922
    %v925 = vmul.f32 %v918, %v923
    %927 = vrot.lane.b32.xlu0 %v925, 32
    %v928 = vpop.permute.xlu0 %927
    %v930 = vadd.f32 %v920, %v928
    %v931 = vtanh.pop %v930
    %933 = vrot.lane.b32.xlu0 %v931, 32
    %v934 = vpop.permute.xlu0 %933
    %v936 = vmul.f32 %v918, %v934
    %938 = vrot.lane.b32.xlu0 %v936, 64
    %v939 = vpop.permute.xlu0 %938
    %v940 = vsel %vm152, %v939, 0
    %942 = vmatprep.subr.mxu0 0.0
    %943 = vmatpush1.msra.mxu0 0.0
    %944 = vmatprep.subr.mxu0 0.0
    %945 = vmatpush1.msra.mxu0 0.0
    %946 = vmatprep.subr.mxu0 0.0
    %947 = vmatpush1.msra.mxu0 0.0
    %948 = vmatprep.subr.mxu0 0.0
    %949 = vmatpush1.msra.mxu0 0.0
    %950 = vmatprep.subr.mxu0 0.0
    %951 = vmatpush1.msra.mxu0 0.0
    %952 = vmatprep.subr.mxu0 0.0
    %953 = vmatpush1.msra.mxu0 0.0
    %954 = vmatprep.subr.mxu0 0.0
    %955 = vmatpush1.msra.mxu0 0.0
    %956 = vmatprep.subr.mxu0 0.0
    %957 = vmatpush1.msra.mxu0 0.0
    %958 = vmatprep.subr.mxu0 0.0
    %959 = vmatpush1.msra.mxu0 0.0
    %960 = vmatprep.subr.mxu0 0.0
    %961 = vmatpush1.msra.mxu0 0.0
    %962 = vmatprep.subr.mxu0 0.0
    %963 = vmatpush1.msra.mxu0 0.0
    %964 = vmatprep.subr.mxu0 0.0
    %965 = vmatpush1.msra.mxu0 0.0
    %966 = vmatprep.subr.mxu0 %v145
    %967 = vmatpush1.msra.mxu0 %v144
    %968 = vmatprep.subr.mxu0 %v143
    %969 = vmatpush1.msra.mxu0 %v142
    %970 = vmatprep.subr.mxu0 %v141
    %971 = vmatpush1.msra.mxu0 %v140
    %972 = vmatprep.subr.mxu0 %v139
    %973 = vmatpush1.msra.mxu0 %v138
    %974 = vmatprep.subr.mxu0 0.0
    %975 = vmatpush2.msra.mxu0 0.0
    %976 = vmatprep.subr.mxu0 0.0
    %977 = vmatpush2.msra.mxu0 0.0
    %978 = vmatprep.subr.mxu0 0.0
    %979 = vmatpush2.msra.mxu0 0.0
    %980 = vmatprep.subr.mxu0 0.0
    %981 = vmatpush2.msra.mxu0 0.0
    %982 = vmatprep.subr.mxu0 0.0
    %983 = vmatpush2.msra.mxu0 0.0
    %984 = vmatprep.subr.mxu0 0.0
    %985 = vmatpush2.msra.mxu0 0.0
    %986 = vmatprep.subr.mxu0 0.0
    %987 = vmatpush2.msra.mxu0 0.0
    %988 = vmatprep.subr.mxu0 0.0
    %989 = vmatpush2.msra.mxu0 0.0
    %990 = vmatprep.subr.mxu0 0.0
    %991 = vmatpush2.msra.mxu0 0.0
    %992 = vmatprep.subr.mxu0 0.0
    %993 = vmatpush2.msra.mxu0 0.0
    %994 = vmatprep.subr.mxu0 0.0
    %995 = vmatpush2.msra.mxu0 0.0
    %996 = vmatprep.subr.mxu0 0.0
    %997 = vmatpush2.msra.mxu0 0.0
    %998 = vmatprep.subr.mxu0 0.0
    %999 = vmatpush2.msra.mxu0 0.0
    %1000 = vmatprep.subr.mxu0 0.0
    %1001 = vmatpush2.msra.mxu0 0.0
    %1002 = vmatprep.subr.mxu0 0.0
    %1003 = vmatpush2.msra.mxu0 0.0
    %1004 = vmatprep.subr.mxu0 0.0
    %1005 = vmatpush2.msra.mxu0 0.0
    %1006 = vmatprep.mubr.f32.mxu0 0.0
    %1007 = vmatmul.mubr.f32.gmra.mxu0 %v940
    %v1008 = vpop.f32.mrf.mxu0
    %v1009 = vadd.f32 0.0, %v1008
    %v1010 = vpop.f32.mrf.mxu0
    %v1011 = vadd.f32 0.0, %v1010
    %1012 = vdwg.mxu0
    %v1014 = vrot.slane %v1009, 2
    %v1016 = vadd.f32 %v134, %v1014
    %v1018 = vrot.slane %v1011, 2
    %v1020 = vadd.f32 %v130, %v1018
    %v1022 = vrot.slane %v1016, 6
    %v1025 = vrot.slane %v1020, 6
    %v1027 = vsel %vm235, %v1022, %v1025
    %v1028 = vxor.u32 %v1027, 2147483648
    %v1029 = vmul.f32 %v1028, 1.442695
    %v1030 = vpow.pop %v1029
    %v1031 = vadd.f32 %v1030, 1.0
    %v1032 = vrcp.pop %v1031
    %v1033 = vmul.f32 1.0, %v1032
    %v1034 = vtanh.pop %v1027
    %v1035 = vmul.f32 %v1033, %v930
    %1037 = vrot.lane.b32.xlu0 %v1034, 32
    %v1038 = vpop.permute.xlu0 %1037
    %v1040 = vmul.f32 %v1033, %v1038
    %1042 = vrot.lane.b32.xlu0 %v1040, 32
    %v1043 = vpop.permute.xlu0 %1042
    %v1045 = vadd.f32 %v1035, %v1043
    %v1046 = vtanh.pop %v1045
    %1048 = vrot.lane.b32.xlu0 %v1046, 32
    %v1049 = vpop.permute.xlu0 %1048
    %v1051 = vmul.f32 %v1033, %v1049
    %v1052 = vrot.slane %v379, 6
    %v1054 = vrot.slane %v488, 4
    %v1056 = vrot.slane %v603, 2
    %v1058 = vrot.slane %v827, 6
    %v1060 = vrot.slane %v936, 4
    %v1063 = vrot.slane %v1051, 2
    %v1065 = vsel %vm235, %v264, %v1052
    %vm1066 = vcmask 1043456
    %v1067 = vsel %vm1066, %v1065, %v1054
    %vm1068 = vcmask 1045504
    %v1069 = vsel %vm1068, %v1067, %v1056
    %v1070 = vsel %vm235, %v712, %v1058
    %v1071 = vsel %vm1066, %v1070, %v1060
    %v1072 = vsel %vm1068, %v1071, %v1063
    %v1073 = vrot.slane %v712, 4
    %v1075 = vrot.slane %v264, 4
    %v1077 = vsel %vm235, %v1063, %v936
    %v1078 = vsel %vm1066, %v1077, %v1058
    %v1079 = vsel %vm1068, %v1078, %v1073
    %v1080 = vsel %vm235, %v1056, %v488
    %v1081 = vsel %vm1066, %v1080, %v1052
    %v1082 = vsel %vm1068, %v1081, %v1075
    %1085 = vrot.lane.b32.xlu0 %v1069, 64
    %v1086 = vpop.permute.xlu0 %1085
    %1087 = vrot.lane.b32.xlu0 %v1072, 64
    %v1088 = vpop.permute.xlu0 %1087
    %1093 = vrot.lane.b32.xlu0 %v1079, 96
    %v1094 = vpop.permute.xlu0 %1093
    %1095 = vrot.lane.b32.xlu0 %v1082, 96
    %v1096 = vpop.permute.xlu0 %1095
    %v1099 = vsel %vm152, %v1086, %v1094
    %v1100 = vsel %vm152, %v1088, %v1096
    %v1101 = vld [vmem:[%s5] sm:$0xff]
    %v1102 = vld [vmem:[%s5 + $0x8] sm:$0xff]
    %v1103 = vld [vmem:[%s5 + $0x10] sm:$0xff]
    %v1104 = vld [vmem:[%s5 + $0x18] sm:$0xff]
    %v1105 = vld [vmem:[%s5 + $0x20] sm:$0xff]
    %v1106 = vld [vmem:[%s5 + $0x28] sm:$0xff]
    %v1107 = vld [vmem:[%s5 + $0x30] sm:$0xff]
    %v1108 = vld [vmem:[%s5 + $0x38] sm:$0xff]
    %v1109 = vlaneseq
    %v1110 = vshrl.u32 %v1109, 7
    %v1111 = vsub.s32 0, %v1110
    %v1112 = vrot.slane %v147, %v1111
    %vm1113 = vcmask 523264
    %v1115 = vsel %vm1113, %v1099, 0
    %v1118 = vsel %vm1113, %v1100, 0
    %1120 = vmatprep.subr.mxu0 0.0
    %1121 = vmatpush1.msra.mxu0 0.0
    %1122 = vmatprep.subr.mxu0 0.0
    %1123 = vmatpush1.msra.mxu0 0.0
    %1124 = vmatprep.subr.mxu0 0.0
    %1125 = vmatpush1.msra.mxu0 0.0
    %1126 = vmatprep.subr.mxu0 0.0
    %1127 = vmatpush1.msra.mxu0 0.0
    %1128 = vmatprep.subr.mxu0 0.0
    %1129 = vmatpush1.msra.mxu0 0.0
    %1130 = vmatprep.subr.mxu0 0.0
    %1131 = vmatpush1.msra.mxu0 0.0
    %1132 = vmatprep.subr.mxu0 0.0
    %1133 = vmatpush1.msra.mxu0 0.0
    %1134 = vmatprep.subr.mxu0 0.0
    %1135 = vmatpush1.msra.mxu0 0.0
    %1136 = vmatprep.subr.mxu0 0.0
    %1137 = vmatpush1.msra.mxu0 %v1108
    %1138 = vmatprep.subr.mxu0 0.0
    %1139 = vmatpush1.msra.mxu0 %v1107
    %1140 = vmatprep.subr.mxu0 0.0
    %1141 = vmatpush1.msra.mxu0 %v1106
    %1142 = vmatprep.subr.mxu0 0.0
    %1143 = vmatpush1.msra.mxu0 %v1105
    %1144 = vmatprep.subr.mxu0 0.0
    %1145 = vmatpush1.msra.mxu0 %v1104
    %1146 = vmatprep.subr.mxu0 0.0
    %1147 = vmatpush1.msra.mxu0 %v1103
    %1148 = vmatprep.subr.mxu0 0.0
    %1149 = vmatpush1.msra.mxu0 %v1102
    %1150 = vmatprep.subr.mxu0 0.0
    %1151 = vmatpush1.msra.mxu0 %v1101
    %1152 = vmatprep.subr.mxu0 0.0
    %1153 = vmatpush2.msra.mxu0 0.0
    %1154 = vmatprep.subr.mxu0 0.0
    %1155 = vmatpush2.msra.mxu0 0.0
    %1156 = vmatprep.subr.mxu0 0.0
    %1157 = vmatpush2.msra.mxu0 0.0
    %1158 = vmatprep.subr.mxu0 0.0
    %1159 = vmatpush2.msra.mxu0 0.0
    %1160 = vmatprep.subr.mxu0 0.0
    %1161 = vmatpush2.msra.mxu0 0.0
    %1162 = vmatprep.subr.mxu0 0.0
    %1163 = vmatpush2.msra.mxu0 0.0
    %1164 = vmatprep.subr.mxu0 0.0
    %1165 = vmatpush2.msra.mxu0 0.0
    %1166 = vmatprep.subr.mxu0 0.0
    %1167 = vmatpush2.msra.mxu0 0.0
    %1168 = vmatprep.subr.mxu0 0.0
    %1169 = vmatpush2.msra.mxu0 0.0
    %1170 = vmatprep.subr.mxu0 0.0
    %1171 = vmatpush2.msra.mxu0 0.0
    %1172 = vmatprep.subr.mxu0 0.0
    %1173 = vmatpush2.msra.mxu0 0.0
    %1174 = vmatprep.subr.mxu0 0.0
    %1175 = vmatpush2.msra.mxu0 0.0
    %1176 = vmatprep.subr.mxu0 0.0
    %1177 = vmatpush2.msra.mxu0 0.0
    %1178 = vmatprep.subr.mxu0 0.0
    %1179 = vmatpush2.msra.mxu0 0.0
    %1180 = vmatprep.subr.mxu0 0.0
    %1181 = vmatpush2.msra.mxu0 0.0
    %1182 = vmatprep.subr.mxu0 0.0
    %1183 = vmatpush2.msra.mxu0 0.0
    %1184 = vmatprep.mubr.f32.mxu0 0.0
    %1185 = vmatmul.mubr.f32.gmra.mxu0 %v1115
    %v1186 = vpop.f32.mrf.mxu0
    %v1187 = vadd.f32 %v1112, %v1186
    %v1188 = vpop.f32.mrf.mxu0
    %1189 = vmatprep.mubr.f32.mxu0 0.0
    %1190 = vmatmul.mubr.f32.gmra.mxu0 %v1118
    %v1191 = vpop.f32.mrf.mxu0
    %v1192 = vadd.f32 %v1112, %v1191
    %v1193 = vpop.f32.mrf.mxu0
    %1194 = vdwg.mxu0
    %v1195 = vld [vmem:[%s8] sm:$0xff]
    %v1196 = vld [vmem:[%s8 + $0x8] sm:$0xff]
    %v1197 = vlaneseq
    %v1198 = vand.u32 %v1197, 127
    %1199 = vset.pattern.permute.xlu0 0
    %1200 = vperm.xlu0 %1199, %v1195
    %v1201 = vpop.permute.xlu0 %1200
    %1202 = vset.pattern.permute.xlu0 0
    %1203 = vperm.xlu0 %1202, %v1196
    %v1204 = vpop.permute.xlu0 %1203
    %vm1205 = vcmp.eq.s32.totalorder %v1198, %v1201
    %vm1206 = vcmp.eq.s32.totalorder %v1198, %v1204
    %v1207 = vsel %vm1205, 1, 0
    %v1208 = vsel %vm1206, 1, 0
    %v1209 = vcvt.s32.f32 %v1207
    %v1210 = vcvt.s32.f32 %v1208
    %1212 = vset.pattern.permute.xlu0 0
    %1213 = vperm.xlu0 %1212, %v1209
    %v1214 = vpop.permute.xlu0 %1213
    %1217 = vset.pattern.permute.xlu0 0
    %1218 = vperm.xlu0 %1217, %v1210
    %v1219 = vpop.permute.xlu0 %1218
    %v1221 = vlaneseq
    %v1222 = vshrl.u32 %v1221, 7
    %v1223 = vsub.s32 0, %v1222
    %v1224 = vrot.slane %v146, %v1223
    %v1225 = vmul.f32 %v1214, %v1224
    %v1226 = vmul.f32 %v1219, %v1224
    %1227 = vset.pattern.permute.xlu0 1
    %1228 = vperm.xlu0 %1227, %v1209
    %v1229 = vpop.permute.xlu0 %1228
    %1231 = vset.pattern.permute.xlu0 1
    %1232 = vperm.xlu0 %1231, %v1210
    %v1233 = vpop.permute.xlu0 %1232
    %v1235 = vlaneseq
    %v1236 = vshrl.u32 %v1235, 7
    %v1237 = vsub.s32 1, %v1236
    %v1238 = vrot.slane %v146, %v1237
    %v1239 = vmul.f32 %v1229, %v1238
    %v1240 = vmul.f32 %v1233, %v1238
    %v1241 = vadd.f32 %v1225, %v1239
    %v1242 = vadd.f32 %v1226, %v1240
    %1243 = vset.pattern.permute.xlu0 2
    %1244 = vperm.xlu0 %1243, %v1209
    %v1245 = vpop.permute.xlu0 %1244
    %1247 = vset.pattern.permute.xlu0 2
    %1248 = vperm.xlu0 %1247, %v1210
    %v1249 = vpop.permute.xlu0 %1248
    %v1251 = vlaneseq
    %v1252 = vshrl.u32 %v1251, 7
    %v1253 = vsub.s32 2, %v1252
    %v1254 = vrot.slane %v146, %v1253
    %v1255 = vmul.f32 %v1245, %v1254
    %v1256 = vmul.f32 %v1249, %v1254
    %v1257 = vadd.f32 %v1241, %v1255
    %v1258 = vadd.f32 %v1242, %v1256
    %1259 = vset.pattern.permute.xlu0 3
    %1260 = vperm.xlu0 %1259, %v1209
    %v1261 = vpop.permute.xlu0 %1260
    %1263 = vset.pattern.permute.xlu0 3
    %1264 = vperm.xlu0 %1263, %v1210
    %v1265 = vpop.permute.xlu0 %1264
    %v1267 = vlaneseq
    %v1268 = vshrl.u32 %v1267, 7
    %v1269 = vsub.s32 3, %v1268
    %v1270 = vrot.slane %v146, %v1269
    %v1271 = vmul.f32 %v1261, %v1270
    %v1272 = vmul.f32 %v1265, %v1270
    %v1273 = vadd.f32 %v1257, %v1271
    %v1274 = vadd.f32 %v1258, %v1272
    %1275 = vset.pattern.permute.xlu0 4
    %1276 = vperm.xlu0 %1275, %v1209
    %v1277 = vpop.permute.xlu0 %1276
    %1279 = vset.pattern.permute.xlu0 4
    %1280 = vperm.xlu0 %1279, %v1210
    %v1281 = vpop.permute.xlu0 %1280
    %v1283 = vlaneseq
    %v1284 = vshrl.u32 %v1283, 7
    %v1285 = vsub.s32 4, %v1284
    %v1286 = vrot.slane %v146, %v1285
    %v1287 = vmul.f32 %v1277, %v1286
    %v1288 = vmul.f32 %v1281, %v1286
    %v1289 = vadd.f32 %v1273, %v1287
    %v1290 = vadd.f32 %v1274, %v1288
    %v1293 = vrot.slane %v148, 2
    %v1294 = vrot.slane %v149, 2
    %v1295 = vsel %vm1068, %v1293, %v1294
    %v1298 = vsel %vm1068, %v1294, 0.0
    %v1299 = vsub.f32 %v148, %v1295
    %v1300 = vsub.f32 %v149, %v1298
    %v1301 = vlaneseq
    %v1302 = vshrl.u32 %v1301, 7
    %v1303 = vsub.s32 1, %v1302
    %v1304 = vrot.slane %v147, %v1303
    %v1305 = vadd.f32 %v1304, %v1187
    %v1306 = vmul.f32 %v1305, %v1209
    %v1309 = vrot.slane %v1289, 6
    %v1310 = vrot.slane %v1290, 6
    %v1311 = vsel %vm235, %v1309, %v1310
    %v1314 = vadd.f32 %v1187, %v1309
    %v1315 = vadd.f32 %v1192, %v1311
    %1316 = vset.pattern.permute.xlu0 0
    %1317 = vperm.xlu0 %1316, %v148
    %v1318 = vpop.permute.xlu0 %1317
    %1320 = vset.pattern.permute.xlu0 0
    %1321 = vperm.xlu0 %1320, %v149
    %v1322 = vpop.permute.xlu0 %1321
    %v1324 = vmul.f32 %v1209, %v1318
    %v1325 = vmul.f32 %v1210, %v1322
    %v1326 = vmul.f32 %v1314, %v1324
    %v1327 = vmul.f32 %v1315, %v1325
    %v1328 = vsel %vm235, %v1306, %v1326
    %1330 = vset.pattern.permute.xlu0 0
    %1331 = vperm.xlu0 %1330, %v1299
    %v1332 = vpop.permute.xlu0 %1331
    %1335 = vset.pattern.permute.xlu0 0
    %1336 = vperm.xlu0 %1335, %v1300
    %v1337 = vpop.permute.xlu0 %1336
    %v1339 = vlaneseq
    %v1340 = vshrl.u32 %v1339, 7
    %v1341 = vsub.s32 2, %v1340
    %v1342 = vrot.slane %v147, %v1341
    %v1343 = vmul.f32 %v1332, %v1342
    %v1344 = vmul.f32 %v1337, %v1342
    %v1345 = vmul.f32 %v1209, %v1343
    %v1346 = vmul.f32 %v1210, %v1344
    %v1347 = vadd.f32 %v1328, %v1345
    %v1348 = vadd.f32 %v1327, %v1346
    %vm1349 = vcmask 39936
    %v1350 = vsel %vm1349, %v1347, 0.0
    %v1351 = vsel %vm1349, %v1348, 0.0
    %v1352 = vadd.f32 %v1350, %v1351
    %1353 = vadd.xlane.f32.xlu0 %v1352
    %v1354 = vpop.xlane.xlu0 %1353
    %v1355 = vrot.slane %v1354, 4
    %v1356 = vadd.f32 %v1354, %v1355
    %v1357 = vrot.slane %v1356, 2
    %v1358 = vadd.f32 %v1356, %v1357
    %v1359 = vrot.slane %v1358, 1
    %v1360 = vadd.f32 %v1358, %v1359
    %s1361 = vtos %v1360
    %v1362 = vstv %s1361
    %1364 = vset.pattern.permute.xlu0 0
    %1365 = vperm.xlu0 %1364, %v1305
    %v1366 = vpop.permute.xlu0 %1365
    %v1368 = vadd.f32 %v1366, %v1224
    %1369 = vset.pattern.permute.xlu0 1
    %1370 = vperm.xlu0 %1369, %v1305
    %v1371 = vpop.permute.xlu0 %1370
    %v1373 = vadd.f32 %v1371, %v1238
    %1374 = vset.pattern.permute.xlu0 2
    %1375 = vperm.xlu0 %1374, %v1305
    %v1376 = vpop.permute.xlu0 %1375
    %v1378 = vadd.f32 %v1376, %v1254
    %1379 = vset.pattern.permute.xlu0 3
    %1380 = vperm.xlu0 %1379, %v1305
    %v1381 = vpop.permute.xlu0 %1380
    %v1383 = vadd.f32 %v1381, %v1270
    %1384 = vset.pattern.permute.xlu0 4
    %1385 = vperm.xlu0 %1384, %v1305
    %v1386 = vpop.permute.xlu0 %1385
    %v1388 = vadd.f32 %v1386, %v1286
    %v1389 = vmax.f32 %v1368, %v1373
    %v1390 = vmax.f32 %v1389, %v1378
    %v1391 = vmax.f32 %v1390, %v1383
    %v1392 = vmax.f32 %v1391, %v1388
    %v1393 = vsub.f32 %v1368, %v1392
    %v1394 = vmul.f32 %v1393, 1.442695
    %v1395 = vpow.pop %v1394
    %v1396 = vsub.f32 %v1373, %v1392
    %v1397 = vmul.f32 %v1396, 1.442695
    %v1398 = vpow.pop %v1397
    %v1399 = vadd.f32 %v1395, %v1398
    %v1400 = vsub.f32 %v1378, %v1392
    %v1401 = vmul.f32 %v1400, 1.442695
    %v1402 = vpow.pop %v1401
    %v1403 = vadd.f32 %v1399, %v1402
    %v1404 = vsub.f32 %v1383, %v1392
    %v1405 = vmul.f32 %v1404, 1.442695
    %v1406 = vpow.pop %v1405
    %v1407 = vadd.f32 %v1403, %v1406
    %v1408 = vsub.f32 %v1388, %v1392
    %v1409 = vmul.f32 %v1408, 1.442695
    %v1410 = vpow.pop %v1409
    %v1411 = vadd.f32 %v1407, %v1410
    %v1412 = vlog2.pop %v1411
    %v1413 = vmul.f32 %v1412, 0.6931472
    %v1414 = vadd.f32 %v1413, %v1392
    %v1416 = vrot.slane %v1187, 2
    %v1418 = vadd.f32 %v1414, %v1416
    %vm1419 = vcmp.gt.f32.partialorder %v148, 0.0
    %v1420 = vsel %vm1419, 1, 0
    %1421 = vset.pattern.permute.xlu0 0
    %1422 = vperm.xlu0 %1421, %v1420
    %v1423 = vpop.permute.xlu0 %1422
    %vm1424 = vcmp.eq.s32.totalorder %v1423, 1
    %v1426 = vrot.slane %v1418, 6
    %v1428 = vrot.slane %v1305, 6
    %v1430 = vsel %vm1424, %v1426, %v1428
    %1432 = vset.pattern.permute.xlu0 0
    %1433 = vperm.xlu0 %1432, %v1430
    %v1434 = vpop.permute.xlu0 %1433
    %v1436 = vadd.f32 %v1434, %v1224
    %1437 = vset.pattern.permute.xlu0 1
    %1438 = vperm.xlu0 %1437, %v1430
    %v1439 = vpop.permute.xlu0 %1438
    %v1441 = vadd.f32 %v1439, %v1238
    %1442 = vset.pattern.permute.xlu0 2
    %1443 = vperm.xlu0 %1442, %v1430
    %v1444 = vpop.permute.xlu0 %1443
    %v1446 = vadd.f32 %v1444, %v1254
    %1447 = vset.pattern.permute.xlu0 3
    %1448 = vperm.xlu0 %1447, %v1430
    %v1449 = vpop.permute.xlu0 %1448
    %v1451 = vadd.f32 %v1449, %v1270
    %1452 = vset.pattern.permute.xlu0 4
    %1453 = vperm.xlu0 %1452, %v1430
    %v1454 = vpop.permute.xlu0 %1453
    %v1456 = vadd.f32 %v1454, %v1286
    %v1457 = vmax.f32 %v1436, %v1441
    %v1458 = vmax.f32 %v1457, %v1446
    %v1459 = vmax.f32 %v1458, %v1451
    %v1460 = vmax.f32 %v1459, %v1456
    %v1461 = vsub.f32 %v1436, %v1460
    %v1462 = vmul.f32 %v1461, 1.442695
    %v1463 = vpow.pop %v1462
    %v1464 = vsub.f32 %v1441, %v1460
    %v1465 = vmul.f32 %v1464, 1.442695
    %v1466 = vpow.pop %v1465
    %v1467 = vadd.f32 %v1463, %v1466
    %v1468 = vsub.f32 %v1446, %v1460
    %v1469 = vmul.f32 %v1468, 1.442695
    %v1470 = vpow.pop %v1469
    %v1471 = vadd.f32 %v1467, %v1470
    %v1472 = vsub.f32 %v1451, %v1460
    %v1473 = vmul.f32 %v1472, 1.442695
    %v1474 = vpow.pop %v1473
    %v1475 = vadd.f32 %v1471, %v1474
    %v1476 = vsub.f32 %v1456, %v1460
    %v1477 = vmul.f32 %v1476, 1.442695
    %v1478 = vpow.pop %v1477
    %v1479 = vadd.f32 %v1475, %v1478
    %v1480 = vlog2.pop %v1479
    %v1481 = vmul.f32 %v1480, 0.6931472
    %v1482 = vadd.f32 %v1481, %v1460
    %v1483 = vadd.f32 %v1482, %v1416
    %v1485 = vrot.slane %v1483, 6
    %v1487 = vrot.slane %v1430, 6
    %v1489 = vsel %vm1424, %v1485, %v1487
    %1491 = vset.pattern.permute.xlu0 0
    %1492 = vperm.xlu0 %1491, %v1489
    %v1493 = vpop.permute.xlu0 %1492
    %v1495 = vadd.f32 %v1493, %v1224
    %1496 = vset.pattern.permute.xlu0 1
    %1497 = vperm.xlu0 %1496, %v1489
    %v1498 = vpop.permute.xlu0 %1497
    %v1500 = vadd.f32 %v1498, %v1238
    %1501 = vset.pattern.permute.xlu0 2
    %1502 = vperm.xlu0 %1501, %v1489
    %v1503 = vpop.permute.xlu0 %1502
    %v1505 = vadd.f32 %v1503, %v1254
    %1506 = vset.pattern.permute.xlu0 3
    %1507 = vperm.xlu0 %1506, %v1489
    %v1508 = vpop.permute.xlu0 %1507
    %v1510 = vadd.f32 %v1508, %v1270
    %1511 = vset.pattern.permute.xlu0 4
    %1512 = vperm.xlu0 %1511, %v1489
    %v1513 = vpop.permute.xlu0 %1512
    %v1515 = vadd.f32 %v1513, %v1286
    %v1516 = vmax.f32 %v1495, %v1500
    %v1517 = vmax.f32 %v1516, %v1505
    %v1518 = vmax.f32 %v1517, %v1510
    %v1519 = vmax.f32 %v1518, %v1515
    %v1520 = vsub.f32 %v1495, %v1519
    %v1521 = vmul.f32 %v1520, 1.442695
    %v1522 = vpow.pop %v1521
    %v1523 = vsub.f32 %v1500, %v1519
    %v1524 = vmul.f32 %v1523, 1.442695
    %v1525 = vpow.pop %v1524
    %v1526 = vadd.f32 %v1522, %v1525
    %v1527 = vsub.f32 %v1505, %v1519
    %v1528 = vmul.f32 %v1527, 1.442695
    %v1529 = vpow.pop %v1528
    %v1530 = vadd.f32 %v1526, %v1529
    %v1531 = vsub.f32 %v1510, %v1519
    %v1532 = vmul.f32 %v1531, 1.442695
    %v1533 = vpow.pop %v1532
    %v1534 = vadd.f32 %v1530, %v1533
    %v1535 = vsub.f32 %v1515, %v1519
    %v1536 = vmul.f32 %v1535, 1.442695
    %v1537 = vpow.pop %v1536
    %v1538 = vadd.f32 %v1534, %v1537
    %v1539 = vlog2.pop %v1538
    %v1540 = vmul.f32 %v1539, 0.6931472
    %v1541 = vadd.f32 %v1540, %v1519
    %v1542 = vadd.f32 %v1541, %v1416
    %v1544 = vrot.slane %v1542, 6
    %v1546 = vrot.slane %v1489, 6
    %v1548 = vsel %vm1424, %v1544, %v1546
    %1550 = vset.pattern.permute.xlu0 0
    %1551 = vperm.xlu0 %1550, %v1548
    %v1552 = vpop.permute.xlu0 %1551
    %v1554 = vadd.f32 %v1552, %v1224
    %1555 = vset.pattern.permute.xlu0 1
    %1556 = vperm.xlu0 %1555, %v1548
    %v1557 = vpop.permute.xlu0 %1556
    %v1559 = vadd.f32 %v1557, %v1238
    %1560 = vset.pattern.permute.xlu0 2
    %1561 = vperm.xlu0 %1560, %v1548
    %v1562 = vpop.permute.xlu0 %1561
    %v1564 = vadd.f32 %v1562, %v1254
    %1565 = vset.pattern.permute.xlu0 3
    %1566 = vperm.xlu0 %1565, %v1548
    %v1567 = vpop.permute.xlu0 %1566
    %v1569 = vadd.f32 %v1567, %v1270
    %1570 = vset.pattern.permute.xlu0 4
    %1571 = vperm.xlu0 %1570, %v1548
    %v1572 = vpop.permute.xlu0 %1571
    %v1574 = vadd.f32 %v1572, %v1286
    %v1575 = vmax.f32 %v1554, %v1559
    %v1576 = vmax.f32 %v1575, %v1564
    %v1577 = vmax.f32 %v1576, %v1569
    %v1578 = vmax.f32 %v1577, %v1574
    %v1579 = vsub.f32 %v1554, %v1578
    %v1580 = vmul.f32 %v1579, 1.442695
    %v1581 = vpow.pop %v1580
    %v1582 = vsub.f32 %v1559, %v1578
    %v1583 = vmul.f32 %v1582, 1.442695
    %v1584 = vpow.pop %v1583
    %v1585 = vadd.f32 %v1581, %v1584
    %v1586 = vsub.f32 %v1564, %v1578
    %v1587 = vmul.f32 %v1586, 1.442695
    %v1588 = vpow.pop %v1587
    %v1589 = vadd.f32 %v1585, %v1588
    %v1590 = vsub.f32 %v1569, %v1578
    %v1591 = vmul.f32 %v1590, 1.442695
    %v1592 = vpow.pop %v1591
    %v1593 = vadd.f32 %v1589, %v1592
    %v1594 = vsub.f32 %v1574, %v1578
    %v1595 = vmul.f32 %v1594, 1.442695
    %v1596 = vpow.pop %v1595
    %v1597 = vadd.f32 %v1593, %v1596
    %v1598 = vlog2.pop %v1597
    %v1599 = vmul.f32 %v1598, 0.6931472
    %v1600 = vadd.f32 %v1599, %v1578
    %v1602 = vrot.slane %v1192, 2
    %v1604 = vadd.f32 %v1600, %v1602
    %vm1605 = vcmp.gt.f32.partialorder %v149, 0.0
    %v1606 = vsel %vm1605, 1, 0
    %1607 = vset.pattern.permute.xlu0 0
    %1608 = vperm.xlu0 %1607, %v1606
    %v1609 = vpop.permute.xlu0 %1608
    %vm1610 = vcmp.eq.s32.totalorder %v1609, 1
    %v1612 = vrot.slane %v1604, 6
    %v1614 = vrot.slane %v1548, 6
    %v1616 = vsel %vm1610, %v1612, %v1614
    %1618 = vset.pattern.permute.xlu0 0
    %1619 = vperm.xlu0 %1618, %v1616
    %v1620 = vpop.permute.xlu0 %1619
    %v1622 = vadd.f32 %v1620, %v1224
    %1623 = vset.pattern.permute.xlu0 1
    %1624 = vperm.xlu0 %1623, %v1616
    %v1625 = vpop.permute.xlu0 %1624
    %v1627 = vadd.f32 %v1625, %v1238
    %1628 = vset.pattern.permute.xlu0 2
    %1629 = vperm.xlu0 %1628, %v1616
    %v1630 = vpop.permute.xlu0 %1629
    %v1632 = vadd.f32 %v1630, %v1254
    %1633 = vset.pattern.permute.xlu0 3
    %1634 = vperm.xlu0 %1633, %v1616
    %v1635 = vpop.permute.xlu0 %1634
    %v1637 = vadd.f32 %v1635, %v1270
    %1638 = vset.pattern.permute.xlu0 4
    %1639 = vperm.xlu0 %1638, %v1616
    %v1640 = vpop.permute.xlu0 %1639
    %v1642 = vadd.f32 %v1640, %v1286
    %v1643 = vmax.f32 %v1622, %v1627
    %v1644 = vmax.f32 %v1643, %v1632
    %v1645 = vmax.f32 %v1644, %v1637
    %v1646 = vmax.f32 %v1645, %v1642
    %v1647 = vsub.f32 %v1622, %v1646
    %v1648 = vmul.f32 %v1647, 1.442695
    %v1649 = vpow.pop %v1648
    %v1650 = vsub.f32 %v1627, %v1646
    %v1651 = vmul.f32 %v1650, 1.442695
    %v1652 = vpow.pop %v1651
    %v1653 = vadd.f32 %v1649, %v1652
    %v1654 = vsub.f32 %v1632, %v1646
    %v1655 = vmul.f32 %v1654, 1.442695
    %v1656 = vpow.pop %v1655
    %v1657 = vadd.f32 %v1653, %v1656
    %v1658 = vsub.f32 %v1637, %v1646
    %v1659 = vmul.f32 %v1658, 1.442695
    %v1660 = vpow.pop %v1659
    %v1661 = vadd.f32 %v1657, %v1660
    %v1662 = vsub.f32 %v1642, %v1646
    %v1663 = vmul.f32 %v1662, 1.442695
    %v1664 = vpow.pop %v1663
    %v1665 = vadd.f32 %v1661, %v1664
    %v1666 = vlog2.pop %v1665
    %v1667 = vmul.f32 %v1666, 0.6931472
    %v1668 = vadd.f32 %v1667, %v1646
    %v1669 = vadd.f32 %v1668, %v1602
    %v1671 = vrot.slane %v1669, 6
    %v1673 = vrot.slane %v1616, 6
    %v1675 = vsel %vm1610, %v1671, %v1673
    %1677 = vset.pattern.permute.xlu0 0
    %1678 = vperm.xlu0 %1677, %v1675
    %v1679 = vpop.permute.xlu0 %1678
    %v1681 = vadd.f32 %v1679, %v1224
    %1682 = vset.pattern.permute.xlu0 1
    %1683 = vperm.xlu0 %1682, %v1675
    %v1684 = vpop.permute.xlu0 %1683
    %v1686 = vadd.f32 %v1684, %v1238
    %1687 = vset.pattern.permute.xlu0 2
    %1688 = vperm.xlu0 %1687, %v1675
    %v1689 = vpop.permute.xlu0 %1688
    %v1691 = vadd.f32 %v1689, %v1254
    %1692 = vset.pattern.permute.xlu0 3
    %1693 = vperm.xlu0 %1692, %v1675
    %v1694 = vpop.permute.xlu0 %1693
    %v1696 = vadd.f32 %v1694, %v1270
    %1697 = vset.pattern.permute.xlu0 4
    %1698 = vperm.xlu0 %1697, %v1675
    %v1699 = vpop.permute.xlu0 %1698
    %v1701 = vadd.f32 %v1699, %v1286
    %v1702 = vmax.f32 %v1681, %v1686
    %v1703 = vmax.f32 %v1702, %v1691
    %v1704 = vmax.f32 %v1703, %v1696
    %v1705 = vmax.f32 %v1704, %v1701
    %v1706 = vsub.f32 %v1681, %v1705
    %v1707 = vmul.f32 %v1706, 1.442695
    %v1708 = vpow.pop %v1707
    %v1709 = vsub.f32 %v1686, %v1705
    %v1710 = vmul.f32 %v1709, 1.442695
    %v1711 = vpow.pop %v1710
    %v1712 = vadd.f32 %v1708, %v1711
    %v1713 = vsub.f32 %v1691, %v1705
    %v1714 = vmul.f32 %v1713, 1.442695
    %v1715 = vpow.pop %v1714
    %v1716 = vadd.f32 %v1712, %v1715
    %v1717 = vsub.f32 %v1696, %v1705
    %v1718 = vmul.f32 %v1717, 1.442695
    %v1719 = vpow.pop %v1718
    %v1720 = vadd.f32 %v1716, %v1719
    %v1721 = vsub.f32 %v1701, %v1705
    %v1722 = vmul.f32 %v1721, 1.442695
    %v1723 = vpow.pop %v1722
    %v1724 = vadd.f32 %v1720, %v1723
    %v1725 = vlog2.pop %v1724
    %v1726 = vmul.f32 %v1725, 0.6931472
    %v1727 = vadd.f32 %v1726, %v1705
    %v1728 = vadd.f32 %v1727, %v1602
    %v1730 = vrot.slane %v1728, 6
    %v1732 = vrot.slane %v1675, 6
    %v1734 = vsel %vm1610, %v1730, %v1732
    %1736 = vset.pattern.permute.xlu0 0
    %1737 = vperm.xlu0 %1736, %v1734
    %v1738 = vpop.permute.xlu0 %1737
    %v1740 = vadd.f32 %v1738, %v1224
    %1741 = vset.pattern.permute.xlu0 1
    %1742 = vperm.xlu0 %1741, %v1734
    %v1743 = vpop.permute.xlu0 %1742
    %v1745 = vadd.f32 %v1743, %v1238
    %1746 = vset.pattern.permute.xlu0 2
    %1747 = vperm.xlu0 %1746, %v1734
    %v1748 = vpop.permute.xlu0 %1747
    %v1750 = vadd.f32 %v1748, %v1254
    %1751 = vset.pattern.permute.xlu0 3
    %1752 = vperm.xlu0 %1751, %v1734
    %v1753 = vpop.permute.xlu0 %1752
    %v1755 = vadd.f32 %v1753, %v1270
    %1756 = vset.pattern.permute.xlu0 4
    %1757 = vperm.xlu0 %1756, %v1734
    %v1758 = vpop.permute.xlu0 %1757
    %v1760 = vadd.f32 %v1758, %v1286
    %v1761 = vmax.f32 %v1740, %v1745
    %v1762 = vmax.f32 %v1761, %v1750
    %v1763 = vmax.f32 %v1762, %v1755
    %v1764 = vmax.f32 %v1763, %v1760
    %v1765 = vsub.f32 %v1740, %v1764
    %v1766 = vmul.f32 %v1765, 1.442695
    %v1767 = vpow.pop %v1766
    %v1768 = vsub.f32 %v1745, %v1764
    %v1769 = vmul.f32 %v1768, 1.442695
    %v1770 = vpow.pop %v1769
    %v1771 = vadd.f32 %v1767, %v1770
    %v1772 = vsub.f32 %v1750, %v1764
    %v1773 = vmul.f32 %v1772, 1.442695
    %v1774 = vpow.pop %v1773
    %v1775 = vadd.f32 %v1771, %v1774
    %v1776 = vsub.f32 %v1755, %v1764
    %v1777 = vmul.f32 %v1776, 1.442695
    %v1778 = vpow.pop %v1777
    %v1779 = vadd.f32 %v1775, %v1778
    %v1780 = vsub.f32 %v1760, %v1764
    %v1781 = vmul.f32 %v1780, 1.442695
    %v1782 = vpow.pop %v1781
    %v1783 = vadd.f32 %v1779, %v1782
    %v1784 = vlog2.pop %v1783
    %v1785 = vmul.f32 %v1784, 0.6931472
    %v1786 = vadd.f32 %v1785, %v1764
    %v1787 = vadd.f32 %v1786, %v1602
    %v1789 = vrot.slane %v1787, 6
    %v1791 = vrot.slane %v1734, 6
    %v1793 = vsel %vm1610, %v1789, %v1791
    %v1794 = vadd.f32 %v1793, %v1342
    %vm1795 = vcmask 39942
    %v1796 = vsel %vm1795, %v1794, -inf
    %1797 = vmax.xlane.f32.xlu0 %v1796
    %v1798 = vpop.xlane.xlu0 %1797
    %v1799 = vsub.f32 %v1794, %v1798
    %v1800 = vmul.f32 %v1799, 1.442695
    %v1801 = vpow.pop %v1800
    %v1802 = vsel %vm1795, %v1801, 0.0
    %1803 = vadd.xlane.f32.xlu0 %v1802
    %v1804 = vpop.xlane.xlu0 %1803
    %v1805 = vlog2.pop %v1804
    %v1806 = vmul.f32 %v1805, 0.6931472
    %v1807 = vadd.f32 %v1806, %v1798
    %v1809 = vrot.slane %v1807, 6
    %vm1811 = vcmask 1024
    %v1812 = vsel %vm1811, %v1809, 0.0
    %1813 = vadd.xlane.f32.xlu0 %v1812
    %v1814 = vpop.xlane.xlu0 %1813
    %v1815 = vrot.slane %v1814, 4
    %v1816 = vadd.f32 %v1814, %v1815
    %v1817 = vrot.slane %v1816, 2
    %v1818 = vadd.f32 %v1816, %v1817
    %v1819 = vrot.slane %v1818, 1
    %v1820 = vadd.f32 %v1818, %v1819
    %s1821 = vtos %v1820
    %v1822 = vstv %s1821
    %v1823 = vsub.f32 %v1822, %v1362
    %v1824 = vmul.f32 %v1823, 0.5
    %vm1825 = vcmask 0
    %1826 = vst.msk [vmem:[#allocation2] sm:$0x1] %vm1825, %v1824
    // Predicated region
    $region42: #{bilstm_crf_loss.1} parent=1 // pred_check
      _
    $region43: #{bilstm_crf_loss.1} parent=1 // pred_check_branch
      %1828 = sbr.rel (0) target = $region45
    $region44: #{bilstm_crf_loss.1} parent=1 // pred_region
      %s1830 = ssub.s32 16, 16
      %1831 = vsyncadd [#allocation3], %s1830
      %s1833 = sshll.u32 [#allocation2], 4
      %s1834 = int_to_ptr.vmem [resolvable:$true] %s1833
      %1836 = dma.vmem_to_hbm [thread:$0]  %s1834, 16, %s10, [#allocation3]
    $region45: #{bilstm_crf_loss.1} parent=1 // pred_fallthru
      _
    // Predicated region
    $region46: #{bilstm_crf_loss.1} parent=1 // pred_check
      _
    $region47: #{bilstm_crf_loss.1} parent=1 // pred_check_branch
      %1838 = sbr.rel (0) target = $region49
    $region48: #{bilstm_crf_loss.1} parent=1 // pred_region
      %1839 = dma.done [#allocation3], 16
    $region49: #{bilstm_crf_loss.1} parent=1 // pred_fallthru
      _
    %1840 = vsyncpa [#allocation3], 1

</llo_original>
